<compile_context>
chip_gen: v7x
topology: tpu7x:2x2x1
jax: 0.10.0
libtpu: 0.0.40
codegen_flags: <defaults>
</compile_context>

<pallas_src>
import jax
import jax.numpy as jnp
from jax.experimental import pallas as pl
from jax.experimental.pallas import tpu as pltpu

EPS = 1e-5
MXU_DTYPE = jnp.bfloat16      # matmul operands (f32 accumulation via preferred_element_type)


# --------------------------------------------------------------------------- #
# In-kernel helpers
# --------------------------------------------------------------------------- #
def _conv3x3(pad_ref, w_ref):
    """3x3 'same' conv as ONE MXU matmul with K = 9*C.

    pad_ref : VMEM scratch (H+2, W+2, C) f32; zero border, interior = input tile.
    w_ref   : (9*C, Cout) bf16, tap-major rows ((dy*3 + dx)*C + c).
    returns : (H*W, Cout) f32, rows are pixels in y-major order.
    """
    hp2, wp2, c = pad_ref.shape
    hp, wp = hp2 - 2, wp2 - 2
    cols = []
    for dy in range(3):
        for dx in range(3):
            tap = pad_ref[dy:dy + hp, dx:dx + wp, :]          # shifted view of padded input
            cols.append(tap.reshape(hp * wp, c))
    lhs = jnp.concatenate(cols, axis=1).astype(MXU_DTYPE)      # (H*W, 9*C) im2col slab
    return jnp.dot(lhs, w_ref[...], preferred_element_type=jnp.float32)


def _partial_stats(y):
    """Per-block (sum, sum-of-squares) over pixels -> (2, C) f32."""
    return jnp.concatenate([jnp.sum(y, axis=0, keepdims=True),
                            jnp.sum(y * y, axis=0, keepdims=True)], axis=0)


# --------------------------------------------------------------------------- #
# Pass 1: 2x2 max-pool + conv1  (+ per-image BN1 partials)
# --------------------------------------------------------------------------- #
def _pool_conv1_kernel(xp_ref, w1_ref, y1_ref, s1_ref, pad_ref):
    hp2, wp2, _ = pad_ref.shape
    hp, wp = hp2 - 2, wp2 - 2

    # Zero the padded scratch every step (cheap; correct under megacore splits
    # where this core may never execute grid step 0).
    pad_ref[...] = jnp.zeros_like(pad_ref)

    # 2x2 max-pool: taps live on their own axis -> 3 aligned VPU maxes.
    p = jnp.maximum(jnp.maximum(xp_ref[0, 0], xp_ref[0, 1]),
                    jnp.maximum(xp_ref[0, 2], xp_ref[0, 3]))        # (Hp, Wp, Cin)
    pad_ref[1:hp + 1, 1:wp + 1, :] = p

    y = _conv3x3(pad_ref, w1_ref)                                    # (Hp*Wp, Cmid) f32
    # Conv bias omitted: it cancels exactly under training-mode BatchNorm.

    y1_ref[0] = y.reshape(hp, wp, -1).astype(y1_ref.dtype)
    s1_ref[0] = _partial_stats(y)


# --------------------------------------------------------------------------- #
# Pass 2: folded BN1 + ReLU + conv2  (+ per-image BN2 partials)
# --------------------------------------------------------------------------- #
def _bn1_relu_conv2_kernel(y1_ref, sc1_ref, sh1_ref, w2_ref, y2_ref, s2_ref, pad_ref):
    hp2, wp2, cmid = pad_ref.shape
    hp, wp = hp2 - 2, wp2 - 2

    pad_ref[...] = jnp.zeros_like(pad_ref)

    # Fused BatchNorm1 (pre-folded scale/shift) + ReLU: single FMA + max, f32.
    a = y1_ref[0].astype(jnp.float32)                                # (Hp, Wp, Cmid)
    sc = sc1_ref[...].reshape(1, 1, cmid)
    sh = sh1_ref[...].reshape(1, 1, cmid)
    pad_ref[1:hp + 1, 1:wp + 1, :] = jnp.maximum(a * sc + sh, 0.0)

    y = _conv3x3(pad_ref, w2_ref)                                    # (Hp*Wp, Cout) f32
    y2_ref[0] = y.astype(y2_ref.dtype)
    s2_ref[0] = _partial_stats(y)


# --------------------------------------------------------------------------- #
# Pass 3: folded BN2 + ReLU, emit NCHW-flat (lane-dense) output
# --------------------------------------------------------------------------- #
def _bn2_relu_out_kernel(y2_ref, sc2_ref, sh2_ref, o_ref):
    y = y2_ref[0].astype(jnp.float32)                                # (Hp*Wp, Cout)
    z = jnp.maximum(y * sc2_ref[...] + sh2_ref[...], 0.0)
    # (Cout, Hp*Wp): lane axis = spatial (dense), wrapper reshape to NCHW is free.
    o_ref[0] = jnp.transpose(z)


# --------------------------------------------------------------------------- #
# Wrapper
# --------------------------------------------------------------------------- #
def _bn_scale_shift(partials, gamma, beta, count):
    """Reduce per-image (sum, sum^2) partials -> folded BN affine (scale, shift)."""
    tot = jnp.sum(partials, axis=0)                  # (2, C)
    mean = tot[0] / count
    var = tot[1] / count - mean * mean               # biased variance (training mode)
    scale = gamma * jax.lax.rsqrt(var + EPS)
    shift = beta - mean * scale
    return scale.reshape(1, -1), shift.reshape(1, -1)


def down2d(x_nchw, params):
    """Down2D forward: MaxPool2d(2) -> (Conv3x3 -> BN(train) -> ReLU) x 2."""
    w1, g1, be1 = params["w1"], params["g1"], params["be1"]
    w2, g2, be2 = params["w2"], params["g2"], params["be2"]
    # params["b1"] / params["b2"] cancel under training-mode BN -> unused.

    N, Cin, H, W = x_nchw.shape
    Cmid, Cout = w1.shape[0], w2.shape[0]
    Hp, Wp = H // 2, W // 2
    P = Hp * Wp

    # Layout prep (one fused XLA copy of the input):
    # NCHW -> (N, 4, Hp, Wp, Cin): pool taps on their own axis, channels last.
    x = jnp.transpose(x_nchw, (0, 2, 3, 1))
    xp = (x.reshape(N, Hp, 2, Wp, 2, Cin)
            .transpose(0, 2, 4, 1, 3, 5)
            .reshape(N, 4, Hp, Wp, Cin))

    # Conv weights (O, I, 3, 3) -> tap-major (9*I, O) matmul form, bf16 for the MXU.
    w1f = jnp.transpose(w1, (2, 3, 1, 0)).reshape(9 * Cin, Cmid).astype(MXU_DTYPE)
    w2f = jnp.transpose(w2, (2, 3, 1, 0)).reshape(9 * Cmid, Cout).astype(MXU_DTYPE)

    cparams = pltpu.CompilerParams(
        dimension_semantics=("parallel",),            # images independent in every pass
        vmem_limit_bytes=32 * 1024 * 1024)            # per-image blocks fit all gens (incl. v7x)

    # ---- pass 1 -------------------------------------------------------------
    y1_raw, s1 = pl.pallas_call(
        _pool_conv1_kernel,
        grid=(N,),
        in_specs=[
            pl.BlockSpec((1, 4, Hp, Wp, Cin), lambda n: (n, 0, 0, 0, 0)),
            pl.BlockSpec((9 * Cin, Cmid), lambda n: (0, 0)),
        ],
        out_specs=[
            pl.BlockSpec((1, Hp, Wp, Cmid), lambda n: (n, 0, 0, 0)),
            pl.BlockSpec((1, 2, Cmid), lambda n: (n, 0, 0)),
        ],
        out_shape=[
            jax.ShapeDtypeStruct((N, Hp, Wp, Cmid), jnp.float32),
            jax.ShapeDtypeStruct((N, 2, Cmid), jnp.float32),
        ],
        scratch_shapes=[pltpu.VMEM((Hp + 2, Wp + 2, Cin), jnp.float32)],
        compiler_params=cparams,
    )(xp, w1f)

    sc1, sh1 = _bn_scale_shift(s1, g1, be1, N * P)

    # ---- pass 2 -------------------------------------------------------------
    y2_raw, s2 = pl.pallas_call(
        _bn1_relu_conv2_kernel,
        grid=(N,),
        in_specs=[
            pl.BlockSpec((1, Hp, Wp, Cmid), lambda n: (n, 0, 0, 0)),
            pl.BlockSpec((1, Cmid), lambda n: (0, 0)),
            pl.BlockSpec((1, Cmid), lambda n: (0, 0)),
            pl.BlockSpec((9 * Cmid, Cout), lambda n: (0, 0)),
        ],
        out_specs=[
            pl.BlockSpec((1, P, Cout), lambda n: (n, 0, 0)),
            pl.BlockSpec((1, 2, Cout), lambda n: (n, 0, 0)),
        ],
        out_shape=[
            jax.ShapeDtypeStruct((N, P, Cout), jnp.float32),
            jax.ShapeDtypeStruct((N, 2, Cout), jnp.float32),
        ],
        scratch_shapes=[pltpu.VMEM((Hp + 2, Wp + 2, Cmid), jnp.float32)],
        compiler_params=cparams,
    )(y1_raw, sc1, sh1, w2f)

    sc2, sh2 = _bn_scale_shift(s2, g2, be2, N * P)

    # ---- pass 3 -------------------------------------------------------------
    out = pl.pallas_call(
        _bn2_relu_out_kernel,
        grid=(N,),
        in_specs=[
            pl.BlockSpec((1, P, Cout), lambda n: (n, 0, 0)),
            pl.BlockSpec((1, Cout), lambda n: (0, 0)),
            pl.BlockSpec((1, Cout), lambda n: (0, 0)),
        ],
        out_specs=pl.BlockSpec((1, Cout, P), lambda n: (n, 0, 0)),
        out_shape=jax.ShapeDtypeStruct((N, Cout, P), jnp.float32),
        compiler_params=cparams,
    )(y2_raw, sc2, sh2)

    return out.reshape(N, Cout, Hp, Wp)               # free: already NCHW-ordered


# --------------------------------------------------------------------------- #
# Pure-JAX reference (f32, identical semantics to the PyTorch module forward)
# --------------------------------------------------------------------------- #
def ref_down2d(x, params):
    w1, b1, g1, be1, w2, b2, g2, be2 = (params[k] for k in
        ("w1", "b1", "g1", "be1", "w2", "b2", "g2", "be2"))
    p = jax.lax.reduce_window(x, -jnp.inf, jax.lax.max,
                              (1, 1, 2, 2), (1, 1, 2, 2), "VALID")

    def conv(y, w, b):
        y = jax.lax.conv_general_dilated(y, w, (1, 1), ((1, 1), (1, 1)),
                                         dimension_numbers=("NCHW", "OIHW", "NCHW"))
        return y + b[None, :, None, None]

    def bn_relu(y, g, be):
        mean = y.mean(axis=(0, 2, 3), keepdims=True)
        var = jnp.square(y - mean).mean(axis=(0, 2, 3), keepdims=True)
        yh = (y - mean) / jnp.sqrt(var + EPS)
        return jnp.maximum(yh * g[None, :, None, None] + be[None, :, None, None], 0.0)

    y = bn_relu(conv(p, w1, b1), g1, be1)
    y = bn_relu(conv(y, w2, b2), g2, be2)
    return y


def make_params(key, in_channels, out_channels):
    mid_channels = out_channels
    ks = jax.random.split(key, 4)
    return {
        "w1": 0.1 * jax.random.normal(ks[0], (mid_channels, in_channels, 3, 3), jnp.float32),
        "b1": 0.1 * jax.random.normal(ks[1], (mid_channels,), jnp.float32),
        "g1": jnp.ones((mid_channels,), jnp.float32),
        "be1": jnp.zeros((mid_channels,), jnp.float32),
        "w2": 0.1 * jax.random.normal(ks[2], (out_channels, mid_channels, 3, 3), jnp.float32),
        "b2": 0.1 * jax.random.normal(ks[3], (out_channels,), jnp.float32),
        "g2": jnp.ones((out_channels,), jnp.float32),
        "be2": jnp.zeros((out_channels,), jnp.float32),
    }


if __name__ == "__main__":
    key = jax.random.PRNGKey(0)
    kx, kp = jax.random.split(key)

    N, Cin, H, W = 2, 4, 16, 16
    Cout = 8
    x = jax.random.normal(kx, (N, Cin, H, W), jnp.float32)
    params = make_params(kp, Cin, Cout)

    y = jax.block_until_ready(jax.jit(down2d)(x, params))
    y_ref = ref_down2d(x, params)

    assert y.shape == (N, Cout, H // 2, W // 2), y.shape
    # Tolerance reflects bf16 MXU operands (per perf review) propagated through two
    # convs and two BatchNorm normalizations; BN/ReLU/statistics themselves are f32.
    err = float(jnp.max(jnp.abs(y - y_ref)))
    assert jnp.allclose(y, y_ref, rtol=6e-2, atol=6e-2), f"max|err|={err}"

    print("KERNEL_OK")
</pallas_src>

<mosaic_0001>
module attributes {stable_mosaic.version = 11 : i64} {
  func.func @_pool_conv1_kernel(%arg0: i32, %arg1: memref<1x4x8x8x4xf32, #tpu.memory_space<vmem>>, %arg2: memref<36x8xbf16, #tpu.memory_space<vmem>>, %arg3: memref<1x8x8x8xf32, #tpu.memory_space<vmem>>, %arg4: memref<1x2x8xf32, #tpu.memory_space<vmem>>, %arg5: memref<10x10x4xf32, #tpu.memory_space<vmem>>) attributes {dimension_semantics = [#tpu.dimension_semantics<parallel>], iteration_bounds = array<i64: 2>, scalar_prefetch = 0 : i64, scratch_operands = 1 : i64, tpu.core_type = #tpu.core_type<tc>, window_params = [{transform_indices = @transform_0, window_bounds = array<i64: 1, 4, 8, 8, 4>}, {pipeline_mode = #tpu.pipeline_mode<synchronous>, transform_indices = @transform_1, window_bounds = array<i64: 36, 8>}, {transform_indices = @transform_2, window_bounds = array<i64: 1, 8, 8, 8>}, {transform_indices = @transform_3, window_bounds = array<i64: 1, 2, 8>}]} {
    %cst = arith.constant 0.000000e+00 : f32
    %0 = vector.broadcast %cst : f32 to vector<10x10x4xf32>
    %c0 = arith.constant 0 : index
    %c0_0 = arith.constant 0 : index
    %c0_1 = arith.constant 0 : index
    %1 = vector.load %arg5[%c0, %c0_0, %c0_1] : memref<10x10x4xf32, #tpu.memory_space<vmem>>, vector<10x10x4xf32>
    tpu.vector_store %arg5[%c0, %c0_0, %c0_1], %0 {strides = array<i32>} : memref<10x10x4xf32, #tpu.memory_space<vmem>>, vector<10x10x4xf32>,
    %c0_2 = arith.constant 0 : index
    %c0_3 = arith.constant 0 : index
    %c0_4 = arith.constant 0 : index
    %c0_5 = arith.constant 0 : index
    %c0_6 = arith.constant 0 : index
    %2 = vector.load %arg1[%c0_2, %c0_3, %c0_4, %c0_5, %c0_6] : memref<1x4x8x8x4xf32, #tpu.memory_space<vmem>>, vector<1x1x8x8x4xf32>
    %3 = vector.shape_cast %2 : vector<1x1x8x8x4xf32> to vector<8x8x4xf32>
    %c0_7 = arith.constant 0 : index
    %c1 = arith.constant 1 : index
    %c0_8 = arith.constant 0 : index
    %c0_9 = arith.constant 0 : index
    %c0_10 = arith.constant 0 : index
    %4 = vector.load %arg1[%c0_7, %c1, %c0_8, %c0_9, %c0_10] : memref<1x4x8x8x4xf32, #tpu.memory_space<vmem>>, vector<1x1x8x8x4xf32>
    %5 = vector.shape_cast %4 : vector<1x1x8x8x4xf32> to vector<8x8x4xf32>
    %6 = arith.maximumf %3, %5 : vector<8x8x4xf32>
    %c0_11 = arith.constant 0 : index
    %c2 = arith.constant 2 : index
    %c0_12 = arith.constant 0 : index
    %c0_13 = arith.constant 0 : index
    %c0_14 = arith.constant 0 : index
    %7 = vector.load %arg1[%c0_11, %c2, %c0_12, %c0_13, %c0_14] : memref<1x4x8x8x4xf32, #tpu.memory_space<vmem>>, vector<1x1x8x8x4xf32>
    %8 = vector.shape_cast %7 : vector<1x1x8x8x4xf32> to vector<8x8x4xf32>
    %c0_15 = arith.constant 0 : index
    %c3 = arith.constant 3 : index
    %c0_16 = arith.constant 0 : index
    %c0_17 = arith.constant 0 : index
    %c0_18 = arith.constant 0 : index
    %9 = vector.load %arg1[%c0_15, %c3, %c0_16, %c0_17, %c0_18] : memref<1x4x8x8x4xf32, #tpu.memory_space<vmem>>, vector<1x1x8x8x4xf32>
    %10 = vector.shape_cast %9 : vector<1x1x8x8x4xf32> to vector<8x8x4xf32>
    %11 = arith.maximumf %8, %10 : vector<8x8x4xf32>
    %12 = arith.maximumf %6, %11 : vector<8x8x4xf32>
    %c1_19 = arith.constant 1 : index
    %c1_20 = arith.constant 1 : index
    %c0_21 = arith.constant 0 : index
    %13 = vector.load %arg5[%c1_19, %c1_20, %c0_21] : memref<10x10x4xf32, #tpu.memory_space<vmem>>, vector<8x8x4xf32>
    tpu.vector_store %arg5[%c1_19, %c1_20, %c0_21], %12 {strides = array<i32>} : memref<10x10x4xf32, #tpu.memory_space<vmem>>, vector<8x8x4xf32>,
    %c0_22 = arith.constant 0 : index
    %c0_23 = arith.constant 0 : index
    %c0_24 = arith.constant 0 : index
    %14 = vector.load %arg5[%c0_22, %c0_23, %c0_24] : memref<10x10x4xf32, #tpu.memory_space<vmem>>, vector<8x8x4xf32>
    %15 = vector.shape_cast %14 : vector<8x8x4xf32> to vector<64x4xf32>
    %c0_25 = arith.constant 0 : index
    %c1_26 = arith.constant 1 : index
    %c0_27 = arith.constant 0 : index
    %16 = vector.load %arg5[%c0_25, %c1_26, %c0_27] : memref<10x10x4xf32, #tpu.memory_space<vmem>>, vector<8x8x4xf32>
    %17 = vector.shape_cast %16 : vector<8x8x4xf32> to vector<64x4xf32>
    %c0_28 = arith.constant 0 : index
    %c2_29 = arith.constant 2 : index
    %c0_30 = arith.constant 0 : index
    %18 = vector.load %arg5[%c0_28, %c2_29, %c0_30] : memref<10x10x4xf32, #tpu.memory_space<vmem>>, vector<8x8x4xf32>
    %19 = vector.shape_cast %18 : vector<8x8x4xf32> to vector<64x4xf32>
    %c1_31 = arith.constant 1 : index
    %c0_32 = arith.constant 0 : index
    %c0_33 = arith.constant 0 : index
    %20 = vector.load %arg5[%c1_31, %c0_32, %c0_33] : memref<10x10x4xf32, #tpu.memory_space<vmem>>, vector<8x8x4xf32>
    %21 = vector.shape_cast %20 : vector<8x8x4xf32> to vector<64x4xf32>
    %c1_34 = arith.constant 1 : index
    %c1_35 = arith.constant 1 : index
    %c0_36 = arith.constant 0 : index
    %22 = vector.load %arg5[%c1_34, %c1_35, %c0_36] : memref<10x10x4xf32, #tpu.memory_space<vmem>>, vector<8x8x4xf32>
    %23 = vector.shape_cast %22 : vector<8x8x4xf32> to vector<64x4xf32>
    %c1_37 = arith.constant 1 : index
    %c2_38 = arith.constant 2 : index
    %c0_39 = arith.constant 0 : index
    %24 = vector.load %arg5[%c1_37, %c2_38, %c0_39] : memref<10x10x4xf32, #tpu.memory_space<vmem>>, vector<8x8x4xf32>
    %25 = vector.shape_cast %24 : vector<8x8x4xf32> to vector<64x4xf32>
    %c2_40 = arith.constant 2 : index
    %c0_41 = arith.constant 0 : index
    %c0_42 = arith.constant 0 : index
    %26 = vector.load %arg5[%c2_40, %c0_41, %c0_42] : memref<10x10x4xf32, #tpu.memory_space<vmem>>, vector<8x8x4xf32>
    %27 = vector.shape_cast %26 : vector<8x8x4xf32> to vector<64x4xf32>
    %c2_43 = arith.constant 2 : index
    %c1_44 = arith.constant 1 : index
    %c0_45 = arith.constant 0 : index
    %28 = vector.load %arg5[%c2_43, %c1_44, %c0_45] : memref<10x10x4xf32, #tpu.memory_space<vmem>>, vector<8x8x4xf32>
    %29 = vector.shape_cast %28 : vector<8x8x4xf32> to vector<64x4xf32>
    %c2_46 = arith.constant 2 : index
    %c2_47 = arith.constant 2 : index
    %c0_48 = arith.constant 0 : index
    %30 = vector.load %arg5[%c2_46, %c2_47, %c0_48] : memref<10x10x4xf32, #tpu.memory_space<vmem>>, vector<8x8x4xf32>
    %31 = vector.shape_cast %30 : vector<8x8x4xf32> to vector<64x4xf32>
    %32 = tpu.concatenate %15, %17, %19, %21, %23, %25, %27, %29, %31 in 1 : vector<64x4xf32>, vector<64x4xf32>, vector<64x4xf32>, vector<64x4xf32>, vector<64x4xf32>, vector<64x4xf32>, vector<64x4xf32>, vector<64x4xf32>, vector<64x4xf32> -> vector<64x36xf32>
    %33 = arith.truncf %32 : vector<64x36xf32> to vector<64x36xbf16>
    %c0_49 = arith.constant 0 : index
    %c0_50 = arith.constant 0 : index
    %34 = vector.load %arg2[%c0_49, %c0_50] : memref<36x8xbf16, #tpu.memory_space<vmem>>, vector<36x8xbf16>
    %cst_51 = arith.constant dense<0.000000e+00> : vector<64x8xf32>
    %35 = tpu.matmul %33, %34, %cst_51 {dimension_numbers = #tpu.dot_dimension_numbers<[1], [0], [0], [1], [0, 0, 1, 1], [], []>} : vector<64x36xbf16>, vector<36x8xbf16>, vector<64x8xf32> -> vector<64x8xf32>
    %36 = vector.shape_cast %35 : vector<64x8xf32> to vector<8x8x8xf32>
    %c0_52 = arith.constant 0 : index
    %c0_53 = arith.constant 0 : index
    %c0_54 = arith.constant 0 : index
    %c0_55 = arith.constant 0 : index
    %37 = vector.load %arg3[%c0_52, %c0_53, %c0_54, %c0_55] : memref<1x8x8x8xf32, #tpu.memory_space<vmem>>, vector<1x8x8x8xf32>
    %38 = vector.shape_cast %37 : vector<1x8x8x8xf32> to vector<8x8x8xf32>
    %39 = vector.shape_cast %36 : vector<8x8x8xf32> to vector<1x8x8x8xf32>
    tpu.vector_store %arg3[%c0_52, %c0_53, %c0_54, %c0_55], %39 {strides = array<i32>} : memref<1x8x8x8xf32, #tpu.memory_space<vmem>>, vector<1x8x8x8xf32>,
    %cst_56 = arith.constant dense<0.000000e+00> : vector<8xf32>
    %40 = vector.multi_reduction <add>, %35, %cst_56 [0] : vector<64x8xf32> to vector<8xf32>
    %41 = vector.shape_cast %40 : vector<8xf32> to vector<1x8xf32>
    %42 = arith.mulf %35, %35 : vector<64x8xf32>
    %cst_57 = arith.constant dense<0.000000e+00> : vector<8xf32>
    %43 = vector.multi_reduction <add>, %42, %cst_57 [0] : vector<64x8xf32> to vector<8xf32>
    %44 = vector.shape_cast %43 : vector<8xf32> to vector<1x8xf32>
    %45 = tpu.concatenate %41, %44 in 0 : vector<1x8xf32>, vector<1x8xf32> -> vector<2x8xf32>
    %c0_58 = arith.constant 0 : index
    %c0_59 = arith.constant 0 : index
    %c0_60 = arith.constant 0 : index
    %46 = vector.load %arg4[%c0_58, %c0_59, %c0_60] : memref<1x2x8xf32, #tpu.memory_space<vmem>>, vector<1x2x8xf32>
    %47 = vector.shape_cast %46 : vector<1x2x8xf32> to vector<2x8xf32>
    %48 = vector.shape_cast %45 : vector<2x8xf32> to vector<1x2x8xf32>
    tpu.vector_store %arg4[%c0_58, %c0_59, %c0_60], %48 {strides = array<i32>} : memref<1x2x8xf32, #tpu.memory_space<vmem>>, vector<1x2x8xf32>,
    return
  }
  func.func @transform_0(%arg0: i32) -> (i32, i32, i32, i32, i32) {
    %c0_i32 = arith.constant 0 : i32
    %c0_i32_0 = arith.constant 0 : i32
    %c0_i32_1 = arith.constant 0 : i32
    %c0_i32_2 = arith.constant 0 : i32
    %c0_i32_3 = arith.constant 0 : i32
    return %arg0, %c0_i32, %c0_i32_0, %c0_i32_1, %c0_i32_2 : i32, i32, i32, i32, i32
  }
  func.func @transform_1(%arg0: i32) -> (i32, i32) {
    %c0_i32 = arith.constant 0 : i32
    %c0_i32_0 = arith.constant 0 : i32
    %c0_i32_1 = arith.constant 0 : i32
    return %c0_i32, %c0_i32_0 : i32, i32
  }
  func.func @transform_2(%arg0: i32) -> (i32, i32, i32, i32) {
    %c0_i32 = arith.constant 0 : i32
    %c0_i32_0 = arith.constant 0 : i32
    %c0_i32_1 = arith.constant 0 : i32
    %c0_i32_2 = arith.constant 0 : i32
    return %arg0, %c0_i32, %c0_i32_0, %c0_i32_1 : i32, i32, i32, i32
  }
  func.func @transform_3(%arg0: i32) -> (i32, i32, i32) {
    %c0_i32 = arith.constant 0 : i32
    %c0_i32_0 = arith.constant 0 : i32
    %c0_i32_1 = arith.constant 0 : i32
    return %arg0, %c0_i32, %c0_i32_0 : i32, i32, i32
  }
}

module attributes {stable_mosaic.version = 11 : i64} {
  func.func @_bn2_relu_out_kernel(%arg0: i32, %arg1: memref<1x64x8xf32, #tpu.memory_space<vmem>>, %arg2: memref<1x8xf32, #tpu.memory_space<vmem>>, %arg3: memref<1x8xf32, #tpu.memory_space<vmem>>, %arg4: memref<1x8x64xf32, #tpu.memory_space<vmem>>) attributes {dimension_semantics = [#tpu.dimension_semantics<parallel>], iteration_bounds = array<i64: 2>, scalar_prefetch = 0 : i64, scratch_operands = 0 : i64, tpu.core_type = #tpu.core_type<tc>, window_params = [{transform_indices = @transform_0, window_bounds = array<i64: 1, 64, 8>}, {pipeline_mode = #tpu.pipeline_mode<synchronous>, transform_indices = @transform_1, window_bounds = array<i64: 1, 8>}, {pipeline_mode = #tpu.pipeline_mode<synchronous>, transform_indices = @transform_2, window_bounds = array<i64: 1, 8>}, {transform_indices = @transform_3, window_bounds = array<i64: 1, 8, 64>}]} {
    %c0 = arith.constant 0 : index
    %c0_0 = arith.constant 0 : index
    %c0_1 = arith.constant 0 : index
    %0 = vector.load %arg1[%c0, %c0_0, %c0_1] : memref<1x64x8xf32, #tpu.memory_space<vmem>>, vector<1x64x8xf32>
    %1 = vector.shape_cast %0 : vector<1x64x8xf32> to vector<64x8xf32>
    %c0_2 = arith.constant 0 : index
    %c0_3 = arith.constant 0 : index
    %2 = vector.load %arg2[%c0_2, %c0_3] : memref<1x8xf32, #tpu.memory_space<vmem>>, vector<1x8xf32>
    %3 = vector.broadcast %2 : vector<1x8xf32> to vector<64x8xf32>
    %4 = arith.mulf %1, %3 : vector<64x8xf32>
    %c0_4 = arith.constant 0 : index
    %c0_5 = arith.constant 0 : index
    %5 = vector.load %arg3[%c0_4, %c0_5] : memref<1x8xf32, #tpu.memory_space<vmem>>, vector<1x8xf32>
    %6 = vector.broadcast %5 : vector<1x8xf32> to vector<64x8xf32>
    %7 = arith.addf %4, %6 : vector<64x8xf32>
    %cst = arith.constant 0.000000e+00 : f32
    %8 = vector.broadcast %cst : f32 to vector<64x8xf32>
    %9 = arith.maximumf %7, %8 : vector<64x8xf32>
    %10 = tpu.transpose %9, [1, 0] : vector<64x8xf32> -> vector<8x64xf32>
    %c0_6 = arith.constant 0 : index
    %c0_7 = arith.constant 0 : index
    %c0_8 = arith.constant 0 : index
    %11 = vector.load %arg4[%c0_6, %c0_7, %c0_8] : memref<1x8x64xf32, #tpu.memory_space<vmem>>, vector<1x8x64xf32>
    %12 = vector.shape_cast %11 : vector<1x8x64xf32> to vector<8x64xf32>
    %13 = vector.shape_cast %10 : vector<8x64xf32> to vector<1x8x64xf32>
    tpu.vector_store %arg4[%c0_6, %c0_7, %c0_8], %13 {strides = array<i32>} : memref<1x8x64xf32, #tpu.memory_space<vmem>>, vector<1x8x64xf32>,
    return
  }
  func.func @transform_0(%arg0: i32) -> (i32, i32, i32) {
    %c0_i32 = arith.constant 0 : i32
    %c0_i32_0 = arith.constant 0 : i32
    %c0_i32_1 = arith.constant 0 : i32
    return %arg0, %c0_i32, %c0_i32_0 : i32, i32, i32
  }
  func.func @transform_1(%arg0: i32) -> (i32, i32) {
    %c0_i32 = arith.constant 0 : i32
    %c0_i32_0 = arith.constant 0 : i32
    %c0_i32_1 = arith.constant 0 : i32
    return %c0_i32, %c0_i32_0 : i32, i32
  }
  func.func @transform_2(%arg0: i32) -> (i32, i32) {
    %c0_i32 = arith.constant 0 : i32
    %c0_i32_0 = arith.constant 0 : i32
    %c0_i32_1 = arith.constant 0 : i32
    return %c0_i32, %c0_i32_0 : i32, i32
  }
  func.func @transform_3(%arg0: i32) -> (i32, i32, i32) {
    %c0_i32 = arith.constant 0 : i32
    %c0_i32_0 = arith.constant 0 : i32
    %c0_i32_1 = arith.constant 0 : i32
    return %arg0, %c0_i32, %c0_i32_0 : i32, i32, i32
  }
}

module attributes {stable_mosaic.version = 11 : i64} {
  func.func @_bn1_relu_conv2_kernel(%arg0: i32, %arg1: memref<1x8x8x8xf32, #tpu.memory_space<vmem>>, %arg2: memref<1x8xf32, #tpu.memory_space<vmem>>, %arg3: memref<1x8xf32, #tpu.memory_space<vmem>>, %arg4: memref<72x8xbf16, #tpu.memory_space<vmem>>, %arg5: memref<1x64x8xf32, #tpu.memory_space<vmem>>, %arg6: memref<1x2x8xf32, #tpu.memory_space<vmem>>, %arg7: memref<10x10x8xf32, #tpu.memory_space<vmem>>) attributes {dimension_semantics = [#tpu.dimension_semantics<parallel>], iteration_bounds = array<i64: 2>, scalar_prefetch = 0 : i64, scratch_operands = 1 : i64, tpu.core_type = #tpu.core_type<tc>, window_params = [{transform_indices = @transform_0, window_bounds = array<i64: 1, 8, 8, 8>}, {pipeline_mode = #tpu.pipeline_mode<synchronous>, transform_indices = @transform_1, window_bounds = array<i64: 1, 8>}, {pipeline_mode = #tpu.pipeline_mode<synchronous>, transform_indices = @transform_2, window_bounds = array<i64: 1, 8>}, {pipeline_mode = #tpu.pipeline_mode<synchronous>, transform_indices = @transform_3, window_bounds = array<i64: 72, 8>}, {transform_indices = @transform_4, window_bounds = array<i64: 1, 64, 8>}, {transform_indices = @transform_5, window_bounds = array<i64: 1, 2, 8>}]} {
    %cst = arith.constant 0.000000e+00 : f32
    %0 = vector.broadcast %cst : f32 to vector<10x10x8xf32>
    %c0 = arith.constant 0 : index
    %c0_0 = arith.constant 0 : index
    %c0_1 = arith.constant 0 : index
    %1 = vector.load %arg7[%c0, %c0_0, %c0_1] : memref<10x10x8xf32, #tpu.memory_space<vmem>>, vector<10x10x8xf32>
    tpu.vector_store %arg7[%c0, %c0_0, %c0_1], %0 {strides = array<i32>} : memref<10x10x8xf32, #tpu.memory_space<vmem>>, vector<10x10x8xf32>,
    %c0_2 = arith.constant 0 : index
    %c0_3 = arith.constant 0 : index
    %c0_4 = arith.constant 0 : index
    %c0_5 = arith.constant 0 : index
    %2 = vector.load %arg1[%c0_2, %c0_3, %c0_4, %c0_5] : memref<1x8x8x8xf32, #tpu.memory_space<vmem>>, vector<1x8x8x8xf32>
    %3 = vector.shape_cast %2 : vector<1x8x8x8xf32> to vector<8x8x8xf32>
    %c0_6 = arith.constant 0 : index
    %c0_7 = arith.constant 0 : index
    %4 = vector.load %arg2[%c0_6, %c0_7] : memref<1x8xf32, #tpu.memory_space<vmem>>, vector<1x8xf32>
    %5 = vector.shape_cast %4 : vector<1x8xf32> to vector<1x1x8xf32>
    %c0_8 = arith.constant 0 : index
    %c0_9 = arith.constant 0 : index
    %6 = vector.load %arg3[%c0_8, %c0_9] : memref<1x8xf32, #tpu.memory_space<vmem>>, vector<1x8xf32>
    %7 = vector.shape_cast %6 : vector<1x8xf32> to vector<1x1x8xf32>
    %8 = vector.broadcast %5 : vector<1x1x8xf32> to vector<8x8x8xf32>
    %9 = arith.mulf %3, %8 : vector<8x8x8xf32>
    %10 = vector.broadcast %7 : vector<1x1x8xf32> to vector<8x8x8xf32>
    %11 = arith.addf %9, %10 : vector<8x8x8xf32>
    %cst_10 = arith.constant 0.000000e+00 : f32
    %12 = vector.broadcast %cst_10 : f32 to vector<8x8x8xf32>
    %13 = arith.maximumf %11, %12 : vector<8x8x8xf32>
    %c1 = arith.constant 1 : index
    %c1_11 = arith.constant 1 : index
    %c0_12 = arith.constant 0 : index
    %14 = vector.load %arg7[%c1, %c1_11, %c0_12] : memref<10x10x8xf32, #tpu.memory_space<vmem>>, vector<8x8x8xf32>
    tpu.vector_store %arg7[%c1, %c1_11, %c0_12], %13 {strides = array<i32>} : memref<10x10x8xf32, #tpu.memory_space<vmem>>, vector<8x8x8xf32>,
    %c0_13 = arith.constant 0 : index
    %c0_14 = arith.constant 0 : index
    %c0_15 = arith.constant 0 : index
    %15 = vector.load %arg7[%c0_13, %c0_14, %c0_15] : memref<10x10x8xf32, #tpu.memory_space<vmem>>, vector<8x8x8xf32>
    %16 = vector.shape_cast %15 : vector<8x8x8xf32> to vector<64x8xf32>
    %c0_16 = arith.constant 0 : index
    %c1_17 = arith.constant 1 : index
    %c0_18 = arith.constant 0 : index
    %17 = vector.load %arg7[%c0_16, %c1_17, %c0_18] : memref<10x10x8xf32, #tpu.memory_space<vmem>>, vector<8x8x8xf32>
    %18 = vector.shape_cast %17 : vector<8x8x8xf32> to vector<64x8xf32>
    %c0_19 = arith.constant 0 : index
    %c2 = arith.constant 2 : index
    %c0_20 = arith.constant 0 : index
    %19 = vector.load %arg7[%c0_19, %c2, %c0_20] : memref<10x10x8xf32, #tpu.memory_space<vmem>>, vector<8x8x8xf32>
    %20 = vector.shape_cast %19 : vector<8x8x8xf32> to vector<64x8xf32>
    %c1_21 = arith.constant 1 : index
    %c0_22 = arith.constant 0 : index
    %c0_23 = arith.constant 0 : index
    %21 = vector.load %arg7[%c1_21, %c0_22, %c0_23] : memref<10x10x8xf32, #tpu.memory_space<vmem>>, vector<8x8x8xf32>
    %22 = vector.shape_cast %21 : vector<8x8x8xf32> to vector<64x8xf32>
    %c1_24 = arith.constant 1 : index
    %c1_25 = arith.constant 1 : index
    %c0_26 = arith.constant 0 : index
    %23 = vector.load %arg7[%c1_24, %c1_25, %c0_26] : memref<10x10x8xf32, #tpu.memory_space<vmem>>, vector<8x8x8xf32>
    %24 = vector.shape_cast %23 : vector<8x8x8xf32> to vector<64x8xf32>
    %c1_27 = arith.constant 1 : index
    %c2_28 = arith.constant 2 : index
    %c0_29 = arith.constant 0 : index
    %25 = vector.load %arg7[%c1_27, %c2_28, %c0_29] : memref<10x10x8xf32, #tpu.memory_space<vmem>>, vector<8x8x8xf32>
    %26 = vector.shape_cast %25 : vector<8x8x8xf32> to vector<64x8xf32>
    %c2_30 = arith.constant 2 : index
    %c0_31 = arith.constant 0 : index
    %c0_32 = arith.constant 0 : index
    %27 = vector.load %arg7[%c2_30, %c0_31, %c0_32] : memref<10x10x8xf32, #tpu.memory_space<vmem>>, vector<8x8x8xf32>
    %28 = vector.shape_cast %27 : vector<8x8x8xf32> to vector<64x8xf32>
    %c2_33 = arith.constant 2 : index
    %c1_34 = arith.constant 1 : index
    %c0_35 = arith.constant 0 : index
    %29 = vector.load %arg7[%c2_33, %c1_34, %c0_35] : memref<10x10x8xf32, #tpu.memory_space<vmem>>, vector<8x8x8xf32>
    %30 = vector.shape_cast %29 : vector<8x8x8xf32> to vector<64x8xf32>
    %c2_36 = arith.constant 2 : index
    %c2_37 = arith.constant 2 : index
    %c0_38 = arith.constant 0 : index
    %31 = vector.load %arg7[%c2_36, %c2_37, %c0_38] : memref<10x10x8xf32, #tpu.memory_space<vmem>>, vector<8x8x8xf32>
    %32 = vector.shape_cast %31 : vector<8x8x8xf32> to vector<64x8xf32>
    %33 = tpu.concatenate %16, %18, %20, %22, %24, %26, %28, %30, %32 in 1 : vector<64x8xf32>, vector<64x8xf32>, vector<64x8xf32>, vector<64x8xf32>, vector<64x8xf32>, vector<64x8xf32>, vector<64x8xf32>, vector<64x8xf32>, vector<64x8xf32> -> vector<64x72xf32>
    %34 = arith.truncf %33 : vector<64x72xf32> to vector<64x72xbf16>
    %c0_39 = arith.constant 0 : index
    %c0_40 = arith.constant 0 : index
    %35 = vector.load %arg4[%c0_39, %c0_40] : memref<72x8xbf16, #tpu.memory_space<vmem>>, vector<72x8xbf16>
    %cst_41 = arith.constant dense<0.000000e+00> : vector<64x8xf32>
    %36 = tpu.matmul %34, %35, %cst_41 {dimension_numbers = #tpu.dot_dimension_numbers<[1], [0], [0], [1], [0, 0, 1, 1], [], []>} : vector<64x72xbf16>, vector<72x8xbf16>, vector<64x8xf32> -> vector<64x8xf32>
    %c0_42 = arith.constant 0 : index
    %c0_43 = arith.constant 0 : index
    %c0_44 = arith.constant 0 : index
    %37 = vector.load %arg5[%c0_42, %c0_43, %c0_44] : memref<1x64x8xf32, #tpu.memory_space<vmem>>, vector<1x64x8xf32>
    %38 = vector.shape_cast %37 : vector<1x64x8xf32> to vector<64x8xf32>
    %39 = vector.shape_cast %36 : vector<64x8xf32> to vector<1x64x8xf32>
    tpu.vector_store %arg5[%c0_42, %c0_43, %c0_44], %39 {strides = array<i32>} : memref<1x64x8xf32, #tpu.memory_space<vmem>>, vector<1x64x8xf32>,
    %cst_45 = arith.constant dense<0.000000e+00> : vector<8xf32>
    %40 = vector.multi_reduction <add>, %36, %cst_45 [0] : vector<64x8xf32> to vector<8xf32>
    %41 = vector.shape_cast %40 : vector<8xf32> to vector<1x8xf32>
    %42 = arith.mulf %36, %36 : vector<64x8xf32>
    %cst_46 = arith.constant dense<0.000000e+00> : vector<8xf32>
    %43 = vector.multi_reduction <add>, %42, %cst_46 [0] : vector<64x8xf32> to vector<8xf32>
    %44 = vector.shape_cast %43 : vector<8xf32> to vector<1x8xf32>
    %45 = tpu.concatenate %41, %44 in 0 : vector<1x8xf32>, vector<1x8xf32> -> vector<2x8xf32>
    %c0_47 = arith.constant 0 : index
    %c0_48 = arith.constant 0 : index
    %c0_49 = arith.constant 0 : index
    %46 = vector.load %arg6[%c0_47, %c0_48, %c0_49] : memref<1x2x8xf32, #tpu.memory_space<vmem>>, vector<1x2x8xf32>
    %47 = vector.shape_cast %46 : vector<1x2x8xf32> to vector<2x8xf32>
    %48 = vector.shape_cast %45 : vector<2x8xf32> to vector<1x2x8xf32>
    tpu.vector_store %arg6[%c0_47, %c0_48, %c0_49], %48 {strides = array<i32>} : memref<1x2x8xf32, #tpu.memory_space<vmem>>, vector<1x2x8xf32>,
    return
  }
  func.func @transform_0(%arg0: i32) -> (i32, i32, i32, i32) {
    %c0_i32 = arith.constant 0 : i32
    %c0_i32_0 = arith.constant 0 : i32
    %c0_i32_1 = arith.constant 0 : i32
    %c0_i32_2 = arith.constant 0 : i32
    return %arg0, %c0_i32, %c0_i32_0, %c0_i32_1 : i32, i32, i32, i32
  }
  func.func @transform_1(%arg0: i32) -> (i32, i32) {
    %c0_i32 = arith.constant 0 : i32
    %c0_i32_0 = arith.constant 0 : i32
    %c0_i32_1 = arith.constant 0 : i32
    return %c0_i32, %c0_i32_0 : i32, i32
  }
  func.func @transform_2(%arg0: i32) -> (i32, i32) {
    %c0_i32 = arith.constant 0 : i32
    %c0_i32_0 = arith.constant 0 : i32
    %c0_i32_1 = arith.constant 0 : i32
    return %c0_i32, %c0_i32_0 : i32, i32
  }
  func.func @transform_3(%arg0: i32) -> (i32, i32) {
    %c0_i32 = arith.constant 0 : i32
    %c0_i32_0 = arith.constant 0 : i32
    %c0_i32_1 = arith.constant 0 : i32
    return %c0_i32, %c0_i32_0 : i32, i32
  }
  func.func @transform_4(%arg0: i32) -> (i32, i32, i32) {
    %c0_i32 = arith.constant 0 : i32
    %c0_i32_0 = arith.constant 0 : i32
    %c0_i32_1 = arith.constant 0 : i32
    return %arg0, %c0_i32, %c0_i32_0 : i32, i32, i32
  }
  func.func @transform_5(%arg0: i32) -> (i32, i32, i32) {
    %c0_i32 = arith.constant 0 : i32
    %c0_i32_0 = arith.constant 0 : i32
    %c0_i32_1 = arith.constant 0 : i32
    return %arg0, %c0_i32, %c0_i32_0 : i32, i32, i32
  }
}

</mosaic_0001>

<llo_original>
// kernel: down2d.5
$region0: #{down2d.5}
  #allocation0 [shape = 'u32[]', space=smem, size = 0x4, offset = 0x4, fixed_abs, tag = 'smem constant byte address 0x4 - core index']
  #allocation1 [shape = 'u32[144,128]{1,0:T(1,128)}', space=vmem, size = 0x12000, scoped, tag = 'internal scratch']
  %s0 = inlined_call_operand.vmem [shape: f32[2,64,8], index: 0, kind: input, shape index: {}]
  %s1 = inlined_call_operand.vmem [shape: f32[1,8], index: 1, kind: input, shape index: {}]
  %s2 = inlined_call_operand.vmem [shape: f32[1,8], index: 2, kind: input, shape index: {}]
  %s3 = inlined_call_operand.vmem [shape: f32[2,8,64], index: 3, kind: output, shape index: {}]
  %s4 = sld [smem:[#allocation0]]
  $region45: #{down2d.5} parent=0
    _
  %s6 = ssub.s32 1, %s4
  %s7 = scalar_select 0, %s6, %s4
  loop: start=0, step=1, limit=4
  $region2: #{down2d.5} parent=0 // loop_pre_header
    _
  $region3: #{down2d.5} parent=0 // loop_header
    %s9 = sphi 0, %s13
    %p10 = scmp.ge.s32.totalorder %s9, 4
    %s19 = sphi 0, %s21
    %s22 = sphi 0, %s19
    %s23 = sphi 0, %s22
    %s39 = sphi 0, %s23
    %s43 = sphi 0, %s43
    %s45 = sphi 0, %s43
    %s46 = sphi 0, %s45
    %s60 = sphi 0, %s46
    %s64 = sphi 0, %s64
    %s66 = sphi 0, %s64
    %s67 = sphi 0, %s66
    %s81 = sphi 0, %s67
    %s87 = sphi 0, %s89
    %s90 = sphi 0, %s87
    %s91 = sphi 0, %s90
    %s107 = sphi 0, %s91
  $region4: #{down2d.5} parent=0 // loop_header_branch
    %12 = sbr.rel (%p10) target = $region8
  $region5: #{down2d.5} parent=0 // loop_body
    %s14 = ssub.s32 %s9, 1
    %s15 = ssub.s32 %s9, 2
    %s16 = sadd.s32 %s9, 1
    %s17 = ssub.s32 %s9, %s16
    %p18 = scmp.eq.s32.totalorder %s17, 0
    %s20 = sadd.s32 %s19, 1
    %s21 = scalar_select %p18, %s19, %s20
    %p24 = pneg %p18
    %p25 = scmp.eq.s32.totalorder %s9, 1
    %p26 = por %p24, %p25
    %p27 = scmp.ne.s32.totalorder %s19, %s22
    %p28 = scmp.eq.s32.totalorder %s9, 0
    %p29 = por %p27, %p28
    %p30 = scmp.ne.s32.totalorder %s19, %s22
    %p31 = scmp.eq.s32.totalorder %s14, 1
    %p32 = por %p30, %p31
    %p33 = scmp.ne.s32.totalorder %s22, %s23
    %p34 = scmp.eq.s32.totalorder %s14, 0
    %p35 = por %p33, %p34
    %p36 = scmp.ne.s32.totalorder %s22, %s23
    %p37 = scmp.eq.s32.totalorder %s15, 1
    %p38 = por %p36, %p37
    %p40 = scmp.ne.s32.totalorder %s23, %s39
    %p41 = scmp.eq.s32.totalorder %s15, 0
    %p42 = por %p40, %p41
    %s44 = sadd.s32 %s43, 1
    %p47 = scmp.eq.s32.totalorder %s9, 1
    %p48 = scmp.ne.s32.totalorder %s43, %s45
    %p49 = scmp.eq.s32.totalorder %s9, 0
    %p50 = por %p48, %p49
    %p51 = scmp.ne.s32.totalorder %s43, %s45
    %p52 = scmp.eq.s32.totalorder %s14, 1
    %p53 = por %p51, %p52
    %p54 = scmp.ne.s32.totalorder %s45, %s46
    %p55 = scmp.eq.s32.totalorder %s14, 0
    %p56 = por %p54, %p55
    %p57 = scmp.ne.s32.totalorder %s45, %s46
    %p58 = scmp.eq.s32.totalorder %s15, 1
    %p59 = por %p57, %p58
    %p61 = scmp.ne.s32.totalorder %s46, %s60
    %p62 = scmp.eq.s32.totalorder %s15, 0
    %p63 = por %p61, %p62
    %s65 = sadd.s32 %s64, 1
    %p68 = scmp.eq.s32.totalorder %s9, 1
    %p69 = scmp.ne.s32.totalorder %s64, %s66
    %p70 = scmp.eq.s32.totalorder %s9, 0
    %p71 = por %p69, %p70
    %p72 = scmp.ne.s32.totalorder %s64, %s66
    %p73 = scmp.eq.s32.totalorder %s14, 1
    %p74 = por %p72, %p73
    %p75 = scmp.ne.s32.totalorder %s66, %s67
    %p76 = scmp.eq.s32.totalorder %s14, 0
    %p77 = por %p75, %p76
    %p78 = scmp.ne.s32.totalorder %s66, %s67
    %p79 = scmp.eq.s32.totalorder %s15, 1
    %p80 = por %p78, %p79
    %p82 = scmp.ne.s32.totalorder %s67, %s81
    %p83 = scmp.eq.s32.totalorder %s15, 0
    %p84 = por %p82, %p83
    %s85 = ssub.s32 %s9, %s16
    %p86 = scmp.eq.s32.totalorder %s85, 0
    %s88 = sadd.s32 %s87, 1
    %s89 = scalar_select %p86, %s87, %s88
    %p92 = pneg %p86
    %p93 = scmp.eq.s32.totalorder %s9, 1
    %p94 = por %p92, %p93
    %p95 = scmp.ne.s32.totalorder %s87, %s90
    %p96 = scmp.eq.s32.totalorder %s9, 0
    %p97 = por %p95, %p96
    %p98 = scmp.ne.s32.totalorder %s87, %s90
    %p99 = scmp.eq.s32.totalorder %s14, 1
    %p100 = por %p98, %p99
    %p101 = scmp.ne.s32.totalorder %s90, %s91
    %p102 = scmp.eq.s32.totalorder %s14, 0
    %p103 = por %p101, %p102
    %p104 = scmp.ne.s32.totalorder %s90, %s91
    %p105 = scmp.eq.s32.totalorder %s15, 1
    %p106 = por %p104, %p105
    %p108 = scmp.ne.s32.totalorder %s91, %s107
    %p109 = scmp.eq.s32.totalorder %s15, 0
    %p110 = por %p108, %p109
    %p111 = scmp.le.s32.totalorder 1, %s9
    %p112 = scmp.lt.s32.totalorder %s9, 3
    %p113 = pnand %p111, %p112
    %p114 = pneg %p113
    // Predicated region
    $region9: #{down2d.5} parent=5 // pred_check
      _
    $region10: #{down2d.5} parent=5 // pred_check_branch
      %116 = sbr.rel (%p113) target = $region12
    $region11: #{down2d.5} parent=5 // pred_region
      %s117 = ssub.s32 %s9, 1
      // Predicated region
      $region13: #{down2d.5} parent=11 // pred_check
        %p118 = pneg %p56
      $region14: #{down2d.5} parent=11 // pred_check_branch
        %120 = sbr.rel (%p118) target = $region16
      $region15: #{down2d.5} parent=11 // pred_region
        _
      $region16: #{down2d.5} parent=11 // pred_fallthru
        _
      // Predicated region
      $region17: #{down2d.5} parent=11 // pred_check
        %p121 = pneg %p77
      $region18: #{down2d.5} parent=11 // pred_check_branch
        %123 = sbr.rel (%p121) target = $region20
      $region19: #{down2d.5} parent=11 // pred_region
        _
      $region20: #{down2d.5} parent=11 // pred_fallthru
        _
    $region12: #{down2d.5} parent=5 // pred_fallthru
      _
    %p124 = scmp.lt.s32.totalorder %s9, 2
    // Predicated region
    $region21: #{down2d.5} parent=5 // pred_check
      %p125 = pneg %p124
    $region22: #{down2d.5} parent=5 // pred_check_branch
      %127 = sbr.rel (%p125) target = $region24
    $region23: #{down2d.5} parent=5 // pred_region
      // Predicated region
      $region25: #{down2d.5} parent=23 // pred_check
        %p128 = pneg %p29
      $region26: #{down2d.5} parent=23 // pred_check_branch
        %130 = sbr.rel (%p128) target = $region28
      $region27: #{down2d.5} parent=23 // pred_region
        %p131 = scmp.lt.s32.totalorder %s9, 1
        %s132 = scalar_select %p131, %s9, 1
        %s133 = smul.addr %s132, 8
        %s134 = smul.addr %s133, 8
        %s135 = scalar_lea.vmem %s0, %s134
      $region28: #{down2d.5} parent=23 // pred_fallthru
        _
    $region24: #{down2d.5} parent=5 // pred_fallthru
      _
    %p136 = scmp.le.s32.totalorder 1, %s9
    %p137 = scmp.lt.s32.totalorder %s9, 3
    %p138 = pnand %p136, %p137
    %p139 = pneg %p138
    // Predicated region
    $region29: #{down2d.5} parent=5 // pred_check
      _
    $region30: #{down2d.5} parent=5 // pred_check_branch
      %141 = sbr.rel (%p138) target = $region32
    $region31: #{down2d.5} parent=5 // pred_region
      %s142 = ssub.s32 %s9, 1
      %p143 = scmp.lt.s32.totalorder %s14, 1
      %s144 = scalar_select %p143, %s14, 1
      %s145 = smul.addr %s144, 8
      %s146 = smul.addr %s145, 8
      %s147 = scalar_lea.vmem %s0, %s146
      %p148 = pneg %p35
      %p149 = pneg %p32
      %p150 = pneg %p56
      %p151 = pneg %p53
      %p152 = pneg %p77
      %p153 = pneg %p74
      %p154 = pneg %p103
      %p155 = pneg %p100
      %p156 = scmp.lt.s32.totalorder %s14, 1
      %s157 = scalar_select %p156, %s14, 1
      %s158 = smul.addr %s157, 8
      %s159 = scalar_lea.vmem %s3, %s158
      %p160 = scmp.lt.s32.totalorder %s14, 1
      %s161 = scalar_select %p160, %s14, 1
      %s162 = smul.addr %s161, 8
      %s163 = smul.addr %s162, 8
      %s164 = scalar_lea.vmem %s0, %s163
      %p165 = scmp.lt.s32.totalorder %s14, 1
      %s166 = scalar_select %p165, %s14, 1
      %s167 = smul.addr %s166, 8
      %s168 = scalar_lea.vmem %s3, %s167
      %v169 = vld [vmem:[%s164] sm:$0xff]
      %v170 = vld [vmem:[%s164 + $0x8] sm:$0xff]
      %v171 = vld [vmem:[%s164 + $0x10] sm:$0xff]
      %v172 = vld [vmem:[%s164 + $0x18] sm:$0xff]
      %v173 = vld [vmem:[%s164 + $0x20] sm:$0xff]
      %v174 = vld [vmem:[%s164 + $0x28] sm:$0xff]
      %v175 = vld [vmem:[%s164 + $0x30] sm:$0xff]
      %v176 = vld [vmem:[%s164 + $0x38] sm:$0xff]
      %v177 = vld [vmem:[%s1] sm:$0x1]
      %v179 = vlaneseq
      %v180 = vshrl.u32 %v179, 7
      %v181 = vsub.s32 0, %v180
      %v182 = vrot.slane %v177, %v181
      %v184 = vmul.f32 %v169, %v182
      %v185 = vmul.f32 %v170, %v182
      %v186 = vmul.f32 %v171, %v182
      %v187 = vmul.f32 %v172, %v182
      %v188 = vmul.f32 %v173, %v182
      %v189 = vmul.f32 %v174, %v182
      %v190 = vmul.f32 %v175, %v182
      %v191 = vmul.f32 %v176, %v182
      %v192 = vld [vmem:[%s2] sm:$0x1]
      %v194 = vlaneseq
      %v195 = vshrl.u32 %v194, 7
      %v196 = vsub.s32 0, %v195
      %v197 = vrot.slane %v192, %v196
      %v199 = vadd.f32 %v184, %v197
      %v200 = vadd.f32 %v185, %v197
      %v201 = vadd.f32 %v186, %v197
      %v202 = vadd.f32 %v187, %v197
      %v203 = vadd.f32 %v188, %v197
      %v204 = vadd.f32 %v189, %v197
      %v205 = vadd.f32 %v190, %v197
      %v206 = vadd.f32 %v191, %v197
      %v207 = vmax.f32 %v199, 0.0
      %v208 = vmax.f32 %v200, 0.0
      %v209 = vmax.f32 %v201, 0.0
      %v210 = vmax.f32 %v202, 0.0
      %v211 = vmax.f32 %v203, 0.0
      %v212 = vmax.f32 %v204, 0.0
      %v213 = vmax.f32 %v205, 0.0
      %v214 = vmax.f32 %v206, 0.0
      %215 = vxpose.xlu0.b32.start [1/16] %v207, 128
      %216 = vxpose.xlu0.b32.cont [2/16] %v208, 128
      %217 = vxpose.xlu0.b32.cont [3/16] %v209, 128
      %218 = vxpose.xlu0.b32.cont [4/16] %v210, 128
      %219 = vxpose.xlu0.b32.cont [5/16] %v211, 128
      %220 = vxpose.xlu0.b32.cont [6/16] %v212, 128
      %221 = vxpose.xlu0.b32.cont [7/16] %v213, 128
      %222 = vxpose.xlu0.b32.cont [8/16] %v214, 128
      %223 = vxpose.xlu0.b32.cont [9/16] 0.0, 128
      %224 = vxpose.xlu0.b32.cont [10/16] 0.0, 128
      %225 = vxpose.xlu0.b32.cont [11/16] 0.0, 128
      %226 = vxpose.xlu0.b32.cont [12/16] 0.0, 128
      %227 = vxpose.xlu0.b32.cont [13/16] 0.0, 128
      %228 = vxpose.xlu0.b32.cont [14/16] 0.0, 128
      %229 = vxpose.xlu0.b32.cont [15/16] 0.0, 128
      %230 = vxpose.xlu0.b32.end [16/16] 0.0, 128
      %v231 = vpop.trf.xlu0
      %v232 = vpop.trf.xlu0
      %v233 = vpop.trf.xlu0
      %v234 = vpop.trf.xlu0
      %v235 = vpop.trf.xlu0
      %v236 = vpop.trf.xlu0
      %v237 = vpop.trf.xlu0
      %v238 = vpop.trf.xlu0
      %v239 = vpop.trf.xlu0
      %v240 = vpop.trf.xlu0
      %v241 = vpop.trf.xlu0
      %v242 = vpop.trf.xlu0
      %v243 = vpop.trf.xlu0
      %v244 = vpop.trf.xlu0
      %v245 = vpop.trf.xlu0
      %v246 = vpop.trf.xlu0
      %vm247 = vcmask 523264
      %248 = vst.msk [vmem:[%s168] sm:$0xff] %vm247, %v231
      %p249 = scmp.lt.s32.totalorder %s14, 1
      %s250 = scalar_select %p249, %s14, 1
      %s251 = smul.addr %s250, 8
      %s252 = scalar_lea.vmem %s3, %s251
      // Predicated region
      $region33: #{down2d.5} parent=31 // pred_check
        %p253 = pneg %p100
      $region34: #{down2d.5} parent=31 // pred_check_branch
        %255 = sbr.rel (%p253) target = $region36
      $region35: #{down2d.5} parent=31 // pred_region
        _
      $region36: #{down2d.5} parent=31 // pred_fallthru
        _
    $region32: #{down2d.5} parent=5 // pred_fallthru
      _
    %p256 = scmp.le.s32.totalorder 2, %s9
    // Predicated region
    $region37: #{down2d.5} parent=5 // pred_check
      %p257 = pneg %p256
    $region38: #{down2d.5} parent=5 // pred_check_branch
      %259 = sbr.rel (%p257) target = $region40
    $region39: #{down2d.5} parent=5 // pred_region
      %s260 = ssub.s32 %s9, 2
      // Predicated region
      $region41: #{down2d.5} parent=39 // pred_check
        %p261 = pneg %p106
      $region42: #{down2d.5} parent=39 // pred_check_branch
        %263 = sbr.rel (%p261) target = $region44
      $region43: #{down2d.5} parent=39 // pred_region
        %p264 = scmp.lt.s32.totalorder %s15, 1
        %s265 = scalar_select %p264, %s15, 1
        %s266 = smul.addr %s265, 8
        %s267 = scalar_lea.vmem %s3, %s266
      $region44: #{down2d.5} parent=39 // pred_fallthru
        _
    $region40: #{down2d.5} parent=5 // pred_fallthru
      _
  $region6: #{down2d.5} parent=0 // loop_footer
    %s13 = sadd.s32 1, %s9
  $region7: #{down2d.5} parent=0 // loop_footer_branch
    %8 = sbr.rel target = $region3
  $region8: #{down2d.5} parent=0 // loop_exit
    _

// kernel: down2d.3
$region0: #{down2d.3}
  #allocation0 [shape = 'u32[]', space=smem, size = 0x4, offset = 0x4, fixed_abs, tag = 'smem constant byte address 0x4 - core index']
  #allocation1 [shape = 'u32[144,128]{1,0:T(1,128)}', space=vmem, size = 0x12000, scoped, tag = 'internal scratch']
  #allocation2 [shape = 'f32[10,10,4]{2,1,0:T(8,128)}', space=vmem, size = 0x14000, scoped, tag = 'scratch operand']
  %s0 = inlined_call_operand.vmem [shape: f32[2,4,8,8,4], index: 0, kind: input, shape index: {}]
  %s1 = inlined_call_operand.vmem [shape: bf16[36,8], index: 1, kind: input, shape index: {}]
  %s2 = inlined_call_operand.vmem [shape: f32[2,8,8,8], index: 2, kind: output, shape index: {0}]
  %s3 = inlined_call_operand.vmem [shape: f32[2,2,8], index: 3, kind: output, shape index: {1}]
  %4 = xla_tuple %s2, %s3
  %s5 = sld [smem:[#allocation0]]
  $region49: #{down2d.3} parent=0
    _
  %s7 = ssub.s32 1, %s5
  %s8 = scalar_select 0, %s7, %s5
  loop: start=0, step=1, limit=4
  $region2: #{down2d.3} parent=0 // loop_pre_header
    _
  $region3: #{down2d.3} parent=0 // loop_header
    %s10 = sphi 0, %s14
    %p11 = scmp.ge.s32.totalorder %s10, 4
    %s20 = sphi 0, %s22
    %s23 = sphi 0, %s20
    %s24 = sphi 0, %s23
    %s40 = sphi 0, %s24
    %s44 = sphi 0, %s44
    %s46 = sphi 0, %s44
    %s47 = sphi 0, %s46
    %s61 = sphi 0, %s47
    %s67 = sphi 0, %s69
    %s70 = sphi 0, %s67
    %s71 = sphi 0, %s70
    %s87 = sphi 0, %s71
    %s93 = sphi 0, %s95
    %s96 = sphi 0, %s93
    %s97 = sphi 0, %s96
    %s113 = sphi 0, %s97
  $region4: #{down2d.3} parent=0 // loop_header_branch
    %13 = sbr.rel (%p11) target = $region8
  $region5: #{down2d.3} parent=0 // loop_body
    %s15 = ssub.s32 %s10, 1
    %s16 = ssub.s32 %s10, 2
    %s17 = sadd.s32 %s10, 1
    %s18 = ssub.s32 %s10, %s17
    %p19 = scmp.eq.s32.totalorder %s18, 0
    %s21 = sadd.s32 %s20, 1
    %s22 = scalar_select %p19, %s20, %s21
    %p25 = pneg %p19
    %p26 = scmp.eq.s32.totalorder %s10, 1
    %p27 = por %p25, %p26
    %p28 = scmp.ne.s32.totalorder %s20, %s23
    %p29 = scmp.eq.s32.totalorder %s10, 0
    %p30 = por %p28, %p29
    %p31 = scmp.ne.s32.totalorder %s20, %s23
    %p32 = scmp.eq.s32.totalorder %s15, 1
    %p33 = por %p31, %p32
    %p34 = scmp.ne.s32.totalorder %s23, %s24
    %p35 = scmp.eq.s32.totalorder %s15, 0
    %p36 = por %p34, %p35
    %p37 = scmp.ne.s32.totalorder %s23, %s24
    %p38 = scmp.eq.s32.totalorder %s16, 1
    %p39 = por %p37, %p38
    %p41 = scmp.ne.s32.totalorder %s24, %s40
    %p42 = scmp.eq.s32.totalorder %s16, 0
    %p43 = por %p41, %p42
    %s45 = sadd.s32 %s44, 1
    %p48 = scmp.eq.s32.totalorder %s10, 1
    %p49 = scmp.ne.s32.totalorder %s44, %s46
    %p50 = scmp.eq.s32.totalorder %s10, 0
    %p51 = por %p49, %p50
    %p52 = scmp.ne.s32.totalorder %s44, %s46
    %p53 = scmp.eq.s32.totalorder %s15, 1
    %p54 = por %p52, %p53
    %p55 = scmp.ne.s32.totalorder %s46, %s47
    %p56 = scmp.eq.s32.totalorder %s15, 0
    %p57 = por %p55, %p56
    %p58 = scmp.ne.s32.totalorder %s46, %s47
    %p59 = scmp.eq.s32.totalorder %s16, 1
    %p60 = por %p58, %p59
    %p62 = scmp.ne.s32.totalorder %s47, %s61
    %p63 = scmp.eq.s32.totalorder %s16, 0
    %p64 = por %p62, %p63
    %s65 = ssub.s32 %s10, %s17
    %p66 = scmp.eq.s32.totalorder %s65, 0
    %s68 = sadd.s32 %s67, 1
    %s69 = scalar_select %p66, %s67, %s68
    %p72 = pneg %p66
    %p73 = scmp.eq.s32.totalorder %s10, 1
    %p74 = por %p72, %p73
    %p75 = scmp.ne.s32.totalorder %s67, %s70
    %p76 = scmp.eq.s32.totalorder %s10, 0
    %p77 = por %p75, %p76
    %p78 = scmp.ne.s32.totalorder %s67, %s70
    %p79 = scmp.eq.s32.totalorder %s15, 1
    %p80 = por %p78, %p79
    %p81 = scmp.ne.s32.totalorder %s70, %s71
    %p82 = scmp.eq.s32.totalorder %s15, 0
    %p83 = por %p81, %p82
    %p84 = scmp.ne.s32.totalorder %s70, %s71
    %p85 = scmp.eq.s32.totalorder %s16, 1
    %p86 = por %p84, %p85
    %p88 = scmp.ne.s32.totalorder %s71, %s87
    %p89 = scmp.eq.s32.totalorder %s16, 0
    %p90 = por %p88, %p89
    %s91 = ssub.s32 %s10, %s17
    %p92 = scmp.eq.s32.totalorder %s91, 0
    %s94 = sadd.s32 %s93, 1
    %s95 = scalar_select %p92, %s93, %s94
    %p98 = pneg %p92
    %p99 = scmp.eq.s32.totalorder %s10, 1
    %p100 = por %p98, %p99
    %p101 = scmp.ne.s32.totalorder %s93, %s96
    %p102 = scmp.eq.s32.totalorder %s10, 0
    %p103 = por %p101, %p102
    %p104 = scmp.ne.s32.totalorder %s93, %s96
    %p105 = scmp.eq.s32.totalorder %s15, 1
    %p106 = por %p104, %p105
    %p107 = scmp.ne.s32.totalorder %s96, %s97
    %p108 = scmp.eq.s32.totalorder %s15, 0
    %p109 = por %p107, %p108
    %p110 = scmp.ne.s32.totalorder %s96, %s97
    %p111 = scmp.eq.s32.totalorder %s16, 1
    %p112 = por %p110, %p111
    %p114 = scmp.ne.s32.totalorder %s97, %s113
    %p115 = scmp.eq.s32.totalorder %s16, 0
    %p116 = por %p114, %p115
    %p117 = scmp.le.s32.totalorder 1, %s10
    %p118 = scmp.lt.s32.totalorder %s10, 3
    %p119 = pnand %p117, %p118
    %p120 = pneg %p119
    // Predicated region
    $region9: #{down2d.3} parent=5 // pred_check
      _
    $region10: #{down2d.3} parent=5 // pred_check_branch
      %122 = sbr.rel (%p119) target = $region12
    $region11: #{down2d.3} parent=5 // pred_region
      %s123 = ssub.s32 %s10, 1
      // Predicated region
      $region13: #{down2d.3} parent=11 // pred_check
        %p124 = pneg %p57
      $region14: #{down2d.3} parent=11 // pred_check_branch
        %126 = sbr.rel (%p124) target = $region16
      $region15: #{down2d.3} parent=11 // pred_region
        _
      $region16: #{down2d.3} parent=11 // pred_fallthru
        _
    $region12: #{down2d.3} parent=5 // pred_fallthru
      _
    %p127 = scmp.lt.s32.totalorder %s10, 2
    // Predicated region
    $region17: #{down2d.3} parent=5 // pred_check
      %p128 = pneg %p127
    $region18: #{down2d.3} parent=5 // pred_check_branch
      %130 = sbr.rel (%p128) target = $region20
    $region19: #{down2d.3} parent=5 // pred_region
      // Predicated region
      $region21: #{down2d.3} parent=19 // pred_check
        %p131 = pneg %p30
      $region22: #{down2d.3} parent=19 // pred_check_branch
        %133 = sbr.rel (%p131) target = $region24
      $region23: #{down2d.3} parent=19 // pred_region
        %p134 = scmp.lt.s32.totalorder %s10, 1
        %s135 = scalar_select %p134, %s10, 1
        %s136 = smul.addr %s135, 32
        %s137 = smul.addr %s136, 8
        %s138 = scalar_lea.vmem %s0, %s137
      $region24: #{down2d.3} parent=19 // pred_fallthru
        _
    $region20: #{down2d.3} parent=5 // pred_fallthru
      _
    %p139 = scmp.le.s32.totalorder 1, %s10
    %p140 = scmp.lt.s32.totalorder %s10, 3
    %p141 = pnand %p139, %p140
    %p142 = pneg %p141
    // Predicated region
    $region25: #{down2d.3} parent=5 // pred_check
      _
    $region26: #{down2d.3} parent=5 // pred_check_branch
      %144 = sbr.rel (%p141) target = $region28
    $region27: #{down2d.3} parent=5 // pred_region
      %s145 = ssub.s32 %s10, 1
      %p146 = scmp.lt.s32.totalorder %s15, 1
      %s147 = scalar_select %p146, %s15, 1
      %s148 = smul.addr %s147, 32
      %s149 = smul.addr %s148, 8
      %s150 = scalar_lea.vmem %s0, %s149
      %p151 = pneg %p36
      %p152 = pneg %p33
      %p153 = pneg %p57
      %p154 = pneg %p54
      %p155 = pneg %p83
      %p156 = pneg %p80
      %p157 = scmp.lt.s32.totalorder %s15, 1
      %s158 = scalar_select %p157, %s15, 1
      %s159 = smul.addr %s158, 8
      %s160 = smul.addr %s159, 8
      %s161 = scalar_lea.vmem %s2, %s160
      %p162 = pneg %p109
      %p163 = pneg %p106
      %p164 = scmp.lt.s32.totalorder %s15, 1
      %s165 = scalar_select %p164, %s15, 1
      %s166 = smul.addr %s165, 2
      %s167 = scalar_lea.vmem %s3, %s166
      %p168 = scmp.lt.s32.totalorder %s15, 1
      %s169 = scalar_select %p168, %s15, 1
      %s170 = smul.addr %s169, 32
      %s171 = smul.addr %s170, 8
      %s172 = scalar_lea.vmem %s0, %s171
      %p173 = scmp.lt.s32.totalorder %s15, 1
      %s174 = scalar_select %p173, %s15, 1
      %s175 = smul.addr %s174, 8
      %s176 = smul.addr %s175, 8
      %s177 = scalar_lea.vmem %s2, %s176
      %p178 = scmp.lt.s32.totalorder %s15, 1
      %s179 = scalar_select %p178, %s15, 1
      %s180 = smul.addr %s179, 2
      %s181 = scalar_lea.vmem %s3, %s180
      %vm183 = vcmask 31744
      %184 = vst.msk [vmem:[#allocation2] sm:$0xff] %vm183, 0.0
      %vm185 = vcmask 25600
      %186 = vst.msk [vmem:[#allocation2 + $0x8] sm:$0x3] %vm185, 0.0
      %187 = vst.msk [vmem:[#allocation2 + $0x10] sm:$0xff] %vm183, 0.0
      %188 = vst.msk [vmem:[#allocation2 + $0x18] sm:$0x3] %vm185, 0.0
      %189 = vst.msk [vmem:[#allocation2 + $0x20] sm:$0xff] %vm183, 0.0
      %190 = vst.msk [vmem:[#allocation2 + $0x28] sm:$0x3] %vm185, 0.0
      %191 = vst.msk [vmem:[#allocation2 + $0x30] sm:$0xff] %vm183, 0.0
      %192 = vst.msk [vmem:[#allocation2 + $0x38] sm:$0x3] %vm185, 0.0
      %193 = vst.msk [vmem:[#allocation2 + $0x40] sm:$0xff] %vm183, 0.0
      %194 = vst.msk [vmem:[#allocation2 + $0x48] sm:$0x3] %vm185, 0.0
      %195 = vst.msk [vmem:[#allocation2 + $0x50] sm:$0xff] %vm183, 0.0
      %196 = vst.msk [vmem:[#allocation2 + $0x58] sm:$0x3] %vm185, 0.0
      %197 = vst.msk [vmem:[#allocation2 + $0x60] sm:$0xff] %vm183, 0.0
      %198 = vst.msk [vmem:[#allocation2 + $0x68] sm:$0x3] %vm185, 0.0
      %199 = vst.msk [vmem:[#allocation2 + $0x70] sm:$0xff] %vm183, 0.0
      %200 = vst.msk [vmem:[#allocation2 + $0x78] sm:$0x3] %vm185, 0.0
      %201 = vst.msk [vmem:[#allocation2 + $0x80] sm:$0xff] %vm183, 0.0
      %202 = vst.msk [vmem:[#allocation2 + $0x88] sm:$0x3] %vm185, 0.0
      %203 = vst.msk [vmem:[#allocation2 + $0x90] sm:$0xff] %vm183, 0.0
      %204 = vst.msk [vmem:[#allocation2 + $0x98] sm:$0x3] %vm185, 0.0
      %v205 = vld [vmem:[%s172] sm:$0xff]
      %v206 = vld [vmem:[%s172 + $0x8] sm:$0xff]
      %v207 = vld [vmem:[%s172 + $0x10] sm:$0xff]
      %v208 = vld [vmem:[%s172 + $0x18] sm:$0xff]
      %v209 = vld [vmem:[%s172 + $0x20] sm:$0xff]
      %v210 = vld [vmem:[%s172 + $0x28] sm:$0xff]
      %v211 = vld [vmem:[%s172 + $0x30] sm:$0xff]
      %v212 = vld [vmem:[%s172 + $0x38] sm:$0xff]
      %s213 = scalar_lea.vmem %s172, 64
      %v214 = vld [vmem:[%s213] sm:$0xff]
      %v215 = vld [vmem:[%s213 + $0x8] sm:$0xff]
      %v216 = vld [vmem:[%s213 + $0x10] sm:$0xff]
      %v217 = vld [vmem:[%s213 + $0x18] sm:$0xff]
      %v218 = vld [vmem:[%s213 + $0x20] sm:$0xff]
      %v219 = vld [vmem:[%s213 + $0x28] sm:$0xff]
      %v220 = vld [vmem:[%s213 + $0x30] sm:$0xff]
      %v221 = vld [vmem:[%s213 + $0x38] sm:$0xff]
      %v222 = vmax.f32 %v205, %v214
      %v223 = vmax.f32 %v206, %v215
      %v224 = vmax.f32 %v207, %v216
      %v225 = vmax.f32 %v208, %v217
      %v226 = vmax.f32 %v209, %v218
      %v227 = vmax.f32 %v210, %v219
      %v228 = vmax.f32 %v211, %v220
      %v229 = vmax.f32 %v212, %v221
      %s230 = scalar_lea.vmem %s172, 128
      %v231 = vld [vmem:[%s230] sm:$0xff]
      %v232 = vld [vmem:[%s230 + $0x8] sm:$0xff]
      %v233 = vld [vmem:[%s230 + $0x10] sm:$0xff]
      %v234 = vld [vmem:[%s230 + $0x18] sm:$0xff]
      %v235 = vld [vmem:[%s230 + $0x20] sm:$0xff]
      %v236 = vld [vmem:[%s230 + $0x28] sm:$0xff]
      %v237 = vld [vmem:[%s230 + $0x30] sm:$0xff]
      %v238 = vld [vmem:[%s230 + $0x38] sm:$0xff]
      %s239 = scalar_lea.vmem %s172, 192
      %v240 = vld [vmem:[%s239] sm:$0xff]
      %v241 = vld [vmem:[%s239 + $0x8] sm:$0xff]
      %v242 = vld [vmem:[%s239 + $0x10] sm:$0xff]
      %v243 = vld [vmem:[%s239 + $0x18] sm:$0xff]
      %v244 = vld [vmem:[%s239 + $0x20] sm:$0xff]
      %v245 = vld [vmem:[%s239 + $0x28] sm:$0xff]
      %v246 = vld [vmem:[%s239 + $0x30] sm:$0xff]
      %v247 = vld [vmem:[%s239 + $0x38] sm:$0xff]
      %v248 = vmax.f32 %v231, %v240
      %v249 = vmax.f32 %v232, %v241
      %v250 = vmax.f32 %v233, %v242
      %v251 = vmax.f32 %v234, %v243
      %v252 = vmax.f32 %v235, %v244
      %v253 = vmax.f32 %v236, %v245
      %v254 = vmax.f32 %v237, %v246
      %v255 = vmax.f32 %v238, %v247
      %v256 = vmax.f32 %v222, %v248
      %v257 = vmax.f32 %v223, %v249
      %v258 = vmax.f32 %v224, %v250
      %v259 = vmax.f32 %v225, %v251
      %v260 = vmax.f32 %v226, %v252
      %v261 = vmax.f32 %v227, %v253
      %v262 = vmax.f32 %v228, %v254
      %v263 = vmax.f32 %v229, %v255
      %s264 = scalar_lea.vmem [#allocation2], 16
      %265 = vst.msk [vmem:[%s264 + $0x1] sm:$0xff] %vm183, %v256
      %266 = vst.msk [vmem:[%s264 + $0x11] sm:$0xff] %vm183, %v257
      %267 = vst.msk [vmem:[%s264 + $0x21] sm:$0xff] %vm183, %v258
      %268 = vst.msk [vmem:[%s264 + $0x31] sm:$0xff] %vm183, %v259
      %269 = vst.msk [vmem:[%s264 + $0x41] sm:$0xff] %vm183, %v260
      %270 = vst.msk [vmem:[%s264 + $0x51] sm:$0xff] %vm183, %v261
      %271 = vst.msk [vmem:[%s264 + $0x61] sm:$0xff] %vm183, %v262
      %272 = vst.msk [vmem:[%s264 + $0x71] sm:$0xff] %vm183, %v263
      %v273 = vld [vmem:[#allocation2] sm:$0xff]
      %v274 = vld [vmem:[#allocation2 + $0x10] sm:$0xff]
      %v275 = vld [vmem:[#allocation2 + $0x20] sm:$0xff]
      %v276 = vld [vmem:[#allocation2 + $0x30] sm:$0xff]
      %v277 = vld [vmem:[#allocation2 + $0x40] sm:$0xff]
      %v278 = vld [vmem:[#allocation2 + $0x50] sm:$0xff]
      %v279 = vld [vmem:[#allocation2 + $0x60] sm:$0xff]
      %v280 = vld [vmem:[#allocation2 + $0x70] sm:$0xff]
      %v281 = vld [vmem:[#allocation2 + $0x1] sm:$0xff]
      %v282 = vld [vmem:[#allocation2 + $0x11] sm:$0xff]
      %v283 = vld [vmem:[#allocation2 + $0x21] sm:$0xff]
      %v284 = vld [vmem:[#allocation2 + $0x31] sm:$0xff]
      %v285 = vld [vmem:[#allocation2 + $0x41] sm:$0xff]
      %v286 = vld [vmem:[#allocation2 + $0x51] sm:$0xff]
      %v287 = vld [vmem:[#allocation2 + $0x61] sm:$0xff]
      %v288 = vld [vmem:[#allocation2 + $0x71] sm:$0xff]
      %v289 = vld [vmem:[#allocation2 + $0x2] sm:$0xff]
      %v290 = vld [vmem:[#allocation2 + $0x12] sm:$0xff]
      %v291 = vld [vmem:[#allocation2 + $0x22] sm:$0xff]
      %v292 = vld [vmem:[#allocation2 + $0x32] sm:$0xff]
      %v293 = vld [vmem:[#allocation2 + $0x42] sm:$0xff]
      %v294 = vld [vmem:[#allocation2 + $0x52] sm:$0xff]
      %v295 = vld [vmem:[#allocation2 + $0x62] sm:$0xff]
      %v296 = vld [vmem:[#allocation2 + $0x72] sm:$0xff]
      %v297 = vld [vmem:[%s264] sm:$0xff]
      %v298 = vld [vmem:[%s264 + $0x10] sm:$0xff]
      %v299 = vld [vmem:[%s264 + $0x20] sm:$0xff]
      %v300 = vld [vmem:[%s264 + $0x30] sm:$0xff]
      %v301 = vld [vmem:[%s264 + $0x40] sm:$0xff]
      %v302 = vld [vmem:[%s264 + $0x50] sm:$0xff]
      %v303 = vld [vmem:[%s264 + $0x60] sm:$0xff]
      %v304 = vld [vmem:[%s264 + $0x70] sm:$0xff]
      %v305 = vld [vmem:[%s264 + $0x1] sm:$0xff]
      %v306 = vld [vmem:[%s264 + $0x11] sm:$0xff]
      %v307 = vld [vmem:[%s264 + $0x21] sm:$0xff]
      %v308 = vld [vmem:[%s264 + $0x31] sm:$0xff]
      %v309 = vld [vmem:[%s264 + $0x41] sm:$0xff]
      %v310 = vld [vmem:[%s264 + $0x51] sm:$0xff]
      %v311 = vld [vmem:[%s264 + $0x61] sm:$0xff]
      %v312 = vld [vmem:[%s264 + $0x71] sm:$0xff]
      %v313 = vld [vmem:[%s264 + $0x2] sm:$0xff]
      %v314 = vld [vmem:[%s264 + $0x12] sm:$0xff]
      %v315 = vld [vmem:[%s264 + $0x22] sm:$0xff]
      %v316 = vld [vmem:[%s264 + $0x32] sm:$0xff]
      %v317 = vld [vmem:[%s264 + $0x42] sm:$0xff]
      %v318 = vld [vmem:[%s264 + $0x52] sm:$0xff]
      %v319 = vld [vmem:[%s264 + $0x62] sm:$0xff]
      %v320 = vld [vmem:[%s264 + $0x72] sm:$0xff]
      %s321 = scalar_lea.vmem [#allocation2], 32
      %v322 = vld [vmem:[%s321] sm:$0xff]
      %v323 = vld [vmem:[%s321 + $0x10] sm:$0xff]
      %v324 = vld [vmem:[%s321 + $0x20] sm:$0xff]
      %v325 = vld [vmem:[%s321 + $0x30] sm:$0xff]
      %v326 = vld [vmem:[%s321 + $0x40] sm:$0xff]
      %v327 = vld [vmem:[%s321 + $0x50] sm:$0xff]
      %v328 = vld [vmem:[%s321 + $0x60] sm:$0xff]
      %v329 = vld [vmem:[%s321 + $0x70] sm:$0xff]
      %v330 = vld [vmem:[%s321 + $0x1] sm:$0xff]
      %v331 = vld [vmem:[%s321 + $0x11] sm:$0xff]
      %v332 = vld [vmem:[%s321 + $0x21] sm:$0xff]
      %v333 = vld [vmem:[%s321 + $0x31] sm:$0xff]
      %v334 = vld [vmem:[%s321 + $0x41] sm:$0xff]
      %v335 = vld [vmem:[%s321 + $0x51] sm:$0xff]
      %v336 = vld [vmem:[%s321 + $0x61] sm:$0xff]
      %v337 = vld [vmem:[%s321 + $0x71] sm:$0xff]
      %v338 = vld [vmem:[%s321 + $0x2] sm:$0xff]
      %v339 = vld [vmem:[%s321 + $0x12] sm:$0xff]
      %v340 = vld [vmem:[%s321 + $0x22] sm:$0xff]
      %v341 = vld [vmem:[%s321 + $0x32] sm:$0xff]
      %v342 = vld [vmem:[%s321 + $0x42] sm:$0xff]
      %v343 = vld [vmem:[%s321 + $0x52] sm:$0xff]
      %v344 = vld [vmem:[%s321 + $0x62] sm:$0xff]
      %v345 = vld [vmem:[%s321 + $0x72] sm:$0xff]
      %354 = vrot.lane.b32.xlu0 %v281, 4
      %v355 = vpop.permute.xlu0 %354
      %356 = vrot.lane.b32.xlu0 %v282, 4
      %v357 = vpop.permute.xlu0 %356
      %358 = vrot.lane.b32.xlu0 %v283, 4
      %v359 = vpop.permute.xlu0 %358
      %360 = vrot.lane.b32.xlu0 %v284, 4
      %v361 = vpop.permute.xlu0 %360
      %362 = vrot.lane.b32.xlu0 %v285, 4
      %v363 = vpop.permute.xlu0 %362
      %364 = vrot.lane.b32.xlu0 %v286, 4
      %v365 = vpop.permute.xlu0 %364
      %366 = vrot.lane.b32.xlu0 %v287, 4
      %v367 = vpop.permute.xlu0 %366
      %368 = vrot.lane.b32.xlu0 %v288, 4
      %v369 = vpop.permute.xlu0 %368
      %386 = vrot.lane.b32.xlu0 %v289, 8
      %v387 = vpop.permute.xlu0 %386
      %388 = vrot.lane.b32.xlu0 %v290, 8
      %v389 = vpop.permute.xlu0 %388
      %390 = vrot.lane.b32.xlu0 %v291, 8
      %v391 = vpop.permute.xlu0 %390
      %392 = vrot.lane.b32.xlu0 %v292, 8
      %v393 = vpop.permute.xlu0 %392
      %394 = vrot.lane.b32.xlu0 %v293, 8
      %v395 = vpop.permute.xlu0 %394
      %396 = vrot.lane.b32.xlu0 %v294, 8
      %v397 = vpop.permute.xlu0 %396
      %398 = vrot.lane.b32.xlu0 %v295, 8
      %v399 = vpop.permute.xlu0 %398
      %400 = vrot.lane.b32.xlu0 %v296, 8
      %v401 = vpop.permute.xlu0 %400
      %418 = vrot.lane.b32.xlu0 %v297, 12
      %v419 = vpop.permute.xlu0 %418
      %420 = vrot.lane.b32.xlu0 %v298, 12
      %v421 = vpop.permute.xlu0 %420
      %422 = vrot.lane.b32.xlu0 %v299, 12
      %v423 = vpop.permute.xlu0 %422
      %424 = vrot.lane.b32.xlu0 %v300, 12
      %v425 = vpop.permute.xlu0 %424
      %426 = vrot.lane.b32.xlu0 %v301, 12
      %v427 = vpop.permute.xlu0 %426
      %428 = vrot.lane.b32.xlu0 %v302, 12
      %v429 = vpop.permute.xlu0 %428
      %430 = vrot.lane.b32.xlu0 %v303, 12
      %v431 = vpop.permute.xlu0 %430
      %432 = vrot.lane.b32.xlu0 %v304, 12
      %v433 = vpop.permute.xlu0 %432
      %450 = vrot.lane.b32.xlu0 %v305, 16
      %v451 = vpop.permute.xlu0 %450
      %452 = vrot.lane.b32.xlu0 %v306, 16
      %v453 = vpop.permute.xlu0 %452
      %454 = vrot.lane.b32.xlu0 %v307, 16
      %v455 = vpop.permute.xlu0 %454
      %456 = vrot.lane.b32.xlu0 %v308, 16
      %v457 = vpop.permute.xlu0 %456
      %458 = vrot.lane.b32.xlu0 %v309, 16
      %v459 = vpop.permute.xlu0 %458
      %460 = vrot.lane.b32.xlu0 %v310, 16
      %v461 = vpop.permute.xlu0 %460
      %462 = vrot.lane.b32.xlu0 %v311, 16
      %v463 = vpop.permute.xlu0 %462
      %464 = vrot.lane.b32.xlu0 %v312, 16
      %v465 = vpop.permute.xlu0 %464
      %482 = vrot.lane.b32.xlu0 %v313, 20
      %v483 = vpop.permute.xlu0 %482
      %484 = vrot.lane.b32.xlu0 %v314, 20
      %v485 = vpop.permute.xlu0 %484
      %486 = vrot.lane.b32.xlu0 %v315, 20
      %v487 = vpop.permute.xlu0 %486
      %488 = vrot.lane.b32.xlu0 %v316, 20
      %v489 = vpop.permute.xlu0 %488
      %490 = vrot.lane.b32.xlu0 %v317, 20
      %v491 = vpop.permute.xlu0 %490
      %492 = vrot.lane.b32.xlu0 %v318, 20
      %v493 = vpop.permute.xlu0 %492
      %494 = vrot.lane.b32.xlu0 %v319, 20
      %v495 = vpop.permute.xlu0 %494
      %496 = vrot.lane.b32.xlu0 %v320, 20
      %v497 = vpop.permute.xlu0 %496
      %514 = vrot.lane.b32.xlu0 %v322, 24
      %v515 = vpop.permute.xlu0 %514
      %516 = vrot.lane.b32.xlu0 %v323, 24
      %v517 = vpop.permute.xlu0 %516
      %518 = vrot.lane.b32.xlu0 %v324, 24
      %v519 = vpop.permute.xlu0 %518
      %520 = vrot.lane.b32.xlu0 %v325, 24
      %v521 = vpop.permute.xlu0 %520
      %522 = vrot.lane.b32.xlu0 %v326, 24
      %v523 = vpop.permute.xlu0 %522
      %524 = vrot.lane.b32.xlu0 %v327, 24
      %v525 = vpop.permute.xlu0 %524
      %526 = vrot.lane.b32.xlu0 %v328, 24
      %v527 = vpop.permute.xlu0 %526
      %528 = vrot.lane.b32.xlu0 %v329, 24
      %v529 = vpop.permute.xlu0 %528
      %546 = vrot.lane.b32.xlu0 %v330, 28
      %v547 = vpop.permute.xlu0 %546
      %548 = vrot.lane.b32.xlu0 %v331, 28
      %v549 = vpop.permute.xlu0 %548
      %550 = vrot.lane.b32.xlu0 %v332, 28
      %v551 = vpop.permute.xlu0 %550
      %552 = vrot.lane.b32.xlu0 %v333, 28
      %v553 = vpop.permute.xlu0 %552
      %554 = vrot.lane.b32.xlu0 %v334, 28
      %v555 = vpop.permute.xlu0 %554
      %556 = vrot.lane.b32.xlu0 %v335, 28
      %v557 = vpop.permute.xlu0 %556
      %558 = vrot.lane.b32.xlu0 %v336, 28
      %v559 = vpop.permute.xlu0 %558
      %560 = vrot.lane.b32.xlu0 %v337, 28
      %v561 = vpop.permute.xlu0 %560
      %578 = vrot.lane.b32.xlu0 %v338, 32
      %v579 = vpop.permute.xlu0 %578
      %580 = vrot.lane.b32.xlu0 %v339, 32
      %v581 = vpop.permute.xlu0 %580
      %582 = vrot.lane.b32.xlu0 %v340, 32
      %v583 = vpop.permute.xlu0 %582
      %584 = vrot.lane.b32.xlu0 %v341, 32
      %v585 = vpop.permute.xlu0 %584
      %586 = vrot.lane.b32.xlu0 %v342, 32
      %v587 = vpop.permute.xlu0 %586
      %588 = vrot.lane.b32.xlu0 %v343, 32
      %v589 = vpop.permute.xlu0 %588
      %590 = vrot.lane.b32.xlu0 %v344, 32
      %v591 = vpop.permute.xlu0 %590
      %592 = vrot.lane.b32.xlu0 %v345, 32
      %v593 = vpop.permute.xlu0 %592
      %v602 = vsel %vm183, %v273, %v355
      %v603 = vsel %vm183, %v274, %v357
      %v604 = vsel %vm183, %v275, %v359
      %v605 = vsel %vm183, %v276, %v361
      %v606 = vsel %vm183, %v277, %v363
      %v607 = vsel %vm183, %v278, %v365
      %v608 = vsel %vm183, %v279, %v367
      %v609 = vsel %vm183, %v280, %v369
      %vm610 = vcmask 64512
      %v611 = vsel %vm610, %v602, %v387
      %v612 = vsel %vm610, %v603, %v389
      %v613 = vsel %vm610, %v604, %v391
      %v614 = vsel %vm610, %v605, %v393
      %v615 = vsel %vm610, %v606, %v395
      %v616 = vsel %vm610, %v607, %v397
      %v617 = vsel %vm610, %v608, %v399
      %v618 = vsel %vm610, %v609, %v401
      %vm619 = vcmask 97280
      %v620 = vsel %vm619, %v611, %v419
      %v621 = vsel %vm619, %v612, %v421
      %v622 = vsel %vm619, %v613, %v423
      %v623 = vsel %vm619, %v614, %v425
      %v624 = vsel %vm619, %v615, %v427
      %v625 = vsel %vm619, %v616, %v429
      %v626 = vsel %vm619, %v617, %v431
      %v627 = vsel %vm619, %v618, %v433
      %vm628 = vcmask 130048
      %v629 = vsel %vm628, %v620, %v451
      %v630 = vsel %vm628, %v621, %v453
      %v631 = vsel %vm628, %v622, %v455
      %v632 = vsel %vm628, %v623, %v457
      %v633 = vsel %vm628, %v624, %v459
      %v634 = vsel %vm628, %v625, %v461
      %v635 = vsel %vm628, %v626, %v463
      %v636 = vsel %vm628, %v627, %v465
      %vm637 = vcmask 162816
      %v638 = vsel %vm637, %v629, %v483
      %v639 = vsel %vm637, %v630, %v485
      %v640 = vsel %vm637, %v631, %v487
      %v641 = vsel %vm637, %v632, %v489
      %v642 = vsel %vm637, %v633, %v491
      %v643 = vsel %vm637, %v634, %v493
      %v644 = vsel %vm637, %v635, %v495
      %v645 = vsel %vm637, %v636, %v497
      %vm646 = vcmask 195584
      %v647 = vsel %vm646, %v638, %v515
      %v648 = vsel %vm646, %v639, %v517
      %v649 = vsel %vm646, %v640, %v519
      %v650 = vsel %vm646, %v641, %v521
      %v651 = vsel %vm646, %v642, %v523
      %v652 = vsel %vm646, %v643, %v525
      %v653 = vsel %vm646, %v644, %v527
      %v654 = vsel %vm646, %v645, %v529
      %vm655 = vcmask 228352
      %v656 = vsel %vm655, %v647, %v547
      %v657 = vsel %vm655, %v648, %v549
      %v658 = vsel %vm655, %v649, %v551
      %v659 = vsel %vm655, %v650, %v553
      %v660 = vsel %vm655, %v651, %v555
      %v661 = vsel %vm655, %v652, %v557
      %v662 = vsel %vm655, %v653, %v559
      %v663 = vsel %vm655, %v654, %v561
      %vm664 = vcmask 261120
      %v665 = vsel %vm664, %v656, %v579
      %v666 = vsel %vm664, %v657, %v581
      %v667 = vsel %vm664, %v658, %v583
      %v668 = vsel %vm664, %v659, %v585
      %v669 = vsel %vm664, %v660, %v587
      %v670 = vsel %vm664, %v661, %v589
      %v671 = vsel %vm664, %v662, %v591
      %v672 = vsel %vm664, %v663, %v593
      %v673 = vpack.c.bf16 %v666, %v665
      %v674 = vpack.c.bf16 %v668, %v667
      %v675 = vpack.c.bf16 %v670, %v669
      %v676 = vpack.c.bf16 %v672, %v671
      %v677 = vld [vmem:[%s1] sm:$0xf]
      %v678 = vld [vmem:[%s1 + $0x4] sm:$0xf]
      %v679 = vld [vmem:[%s1 + $0x8] sm:$0xf]
      %v680 = vld [vmem:[%s1 + $0xc] sm:$0xf]
      %v681 = vld [vmem:[%s1 + $0x10] sm:$0x3]
      %v687 = vunpack.c.l.b16 %v677
      %v688 = vunpack.c.l.b16 %v678
      %v689 = vunpack.c.l.b16 %v679
      %v690 = vunpack.c.l.b16 %v680
      %v691 = vunpack.c.l.b16 %v681
      %v692 = vpack.c.b16 %v688, %v687
      %v693 = vpack.c.b16 %v690, %v689
      %v694 = vpack.c.b16 %v691, %v691
      %vm697 = vcmask 293888
      %v699 = vsel %vm697, %v673, 0
      %v702 = vsel %vm697, %v674, 0
      %v705 = vsel %vm697, %v675, 0
      %v708 = vsel %vm697, %v676, 0
      %vm710 = vcmask 1041408
      %v712 = vsel %vm710, %v694, 0
      %714 = vmatprep.subr.bf16.mxu0 0
      %715 = vmatpush1.bf16.msra.mxu0 %v692
      %716 = vmatprep.subr.bf16.mxu0 0
      %717 = vmatpush1.bf16.msra.mxu0 %v693
      %718 = vmatprep.subr.bf16.mxu0 0
      %719 = vmatpush1.bf16.msra.mxu0 %v712
      %720 = vmatprep.subr.bf16.mxu0 0
      %721 = vmatpush1.bf16.msra.mxu0 0
      %722 = vmatprep.subr.bf16.mxu0 0
      %723 = vmatpush1.bf16.msra.mxu0 0
      %724 = vmatprep.subr.bf16.mxu0 0
      %725 = vmatpush1.bf16.msra.mxu0 0
      %726 = vmatprep.subr.bf16.mxu0 0
      %727 = vmatpush1.bf16.msra.mxu0 0
      %728 = vmatprep.subr.bf16.mxu0 0
      %729 = vmatpush1.bf16.msra.mxu0 0
      %730 = vmatprep.subr.bf16.mxu0 0
      %731 = vmatpush1.bf16.msra.mxu0 0
      %732 = vmatprep.subr.bf16.mxu0 0
      %733 = vmatpush1.bf16.msra.mxu0 0
      %734 = vmatprep.subr.bf16.mxu0 0
      %735 = vmatpush1.bf16.msra.mxu0 0
      %736 = vmatprep.subr.bf16.mxu0 0
      %737 = vmatpush1.bf16.msra.mxu0 0
      %738 = vmatprep.subr.bf16.mxu0 0
      %739 = vmatpush1.bf16.msra.mxu0 0
      %740 = vmatprep.subr.bf16.mxu0 0
      %741 = vmatpush1.bf16.msra.mxu0 0
      %742 = vmatprep.subr.bf16.mxu0 0
      %743 = vmatpush1.bf16.msra.mxu0 0
      %744 = vmatprep.subr.bf16.mxu0 0
      %745 = vmatpush1.bf16.msra.mxu0 0
      %746 = vmatprep.mubr.bf16.mxu0 0
      %747 = vmatmul.mubr.bf16.gmra.mrb[0].mxu0 %v699
      %v748 = vpop.f32.mrb[0].mxu0
      %v749 = vadd.f32 0.0, %v748
      %v750 = vpop.f32.mrb[0].mxu0
      %v751 = vpop.f32.mrb[0].mxu0
      %v752 = vadd.f32 0.0, %v751
      %v753 = vpop.f32.mrb[0].mxu0
      %754 = vmatprep.mubr.bf16.mxu0 0
      %755 = vmatmul.mubr.bf16.gmra.mrb[0].mxu0 %v702
      %v756 = vpop.f32.mrb[0].mxu0
      %v757 = vadd.f32 0.0, %v756
      %v758 = vpop.f32.mrb[0].mxu0
      %v759 = vpop.f32.mrb[0].mxu0
      %v760 = vadd.f32 0.0, %v759
      %v761 = vpop.f32.mrb[0].mxu0
      %762 = vmatprep.mubr.bf16.mxu0 0
      %763 = vmatmul.mubr.bf16.gmra.mrb[0].mxu0 %v705
      %v764 = vpop.f32.mrb[0].mxu0
      %v765 = vadd.f32 0.0, %v764
      %v766 = vpop.f32.mrb[0].mxu0
      %v767 = vpop.f32.mrb[0].mxu0
      %v768 = vadd.f32 0.0, %v767
      %v769 = vpop.f32.mrb[0].mxu0
      %770 = vmatprep.mubr.bf16.mxu0 0
      %771 = vmatmul.mubr.bf16.gmra.mrb[0].mxu0 %v708
      %v772 = vpop.f32.mrb[0].mxu0
      %v773 = vadd.f32 0.0, %v772
      %v774 = vpop.f32.mrb[0].mxu0
      %v775 = vpop.f32.mrb[0].mxu0
      %v776 = vadd.f32 0.0, %v775
      %v777 = vpop.f32.mrb[0].mxu0
      %778 = vdwg.mxu0
      %779 = vst.msk [vmem:[%s177] sm:$0xff] %vm610, %v749
      %780 = vst.msk [vmem:[%s177 + $0x8] sm:$0xff] %vm610, %v752
      %781 = vst.msk [vmem:[%s177 + $0x10] sm:$0xff] %vm610, %v757
      %782 = vst.msk [vmem:[%s177 + $0x18] sm:$0xff] %vm610, %v760
      %783 = vst.msk [vmem:[%s177 + $0x20] sm:$0xff] %vm610, %v765
      %784 = vst.msk [vmem:[%s177 + $0x28] sm:$0xff] %vm610, %v768
      %785 = vst.msk [vmem:[%s177 + $0x30] sm:$0xff] %vm610, %v773
      %786 = vst.msk [vmem:[%s177 + $0x38] sm:$0xff] %vm610, %v776
      %v787 = vsel %vm610, %v749, 0.0
      %v788 = vsel %vm610, %v752, 0.0
      %v789 = vadd.f32 %v787, %v788
      %v790 = vsel %vm610, %v757, 0.0
      %v791 = vadd.f32 %v789, %v790
      %v792 = vsel %vm610, %v760, 0.0
      %v793 = vadd.f32 %v791, %v792
      %v794 = vsel %vm610, %v765, 0.0
      %v795 = vadd.f32 %v793, %v794
      %v796 = vsel %vm610, %v768, 0.0
      %v797 = vadd.f32 %v795, %v796
      %v798 = vsel %vm610, %v773, 0.0
      %v799 = vadd.f32 %v797, %v798
      %v800 = vsel %vm610, %v776, 0.0
      %v801 = vadd.f32 %v799, %v800
      %v802 = vrot.slane %v801, 4
      %v803 = vadd.f32 %v801, %v802
      %v804 = vrot.slane %v803, 2
      %v805 = vadd.f32 %v803, %v804
      %v806 = vrot.slane %v805, 1
      %v807 = vadd.f32 %v805, %v806
      %v808 = vmul.f32 %v749, %v749
      %v809 = vmul.f32 %v752, %v752
      %v810 = vmul.f32 %v757, %v757
      %v811 = vmul.f32 %v760, %v760
      %v812 = vmul.f32 %v765, %v765
      %v813 = vmul.f32 %v768, %v768
      %v814 = vmul.f32 %v773, %v773
      %v815 = vmul.f32 %v776, %v776
      %v816 = vsel %vm610, %v808, 0.0
      %v817 = vsel %vm610, %v809, 0.0
      %v818 = vadd.f32 %v816, %v817
      %v819 = vsel %vm610, %v810, 0.0
      %v820 = vadd.f32 %v818, %v819
      %v821 = vsel %vm610, %v811, 0.0
      %v822 = vadd.f32 %v820, %v821
      %v823 = vsel %vm610, %v812, 0.0
      %v824 = vadd.f32 %v822, %v823
      %v825 = vsel %vm610, %v813, 0.0
      %v826 = vadd.f32 %v824, %v825
      %v827 = vsel %vm610, %v814, 0.0
      %v828 = vadd.f32 %v826, %v827
      %v829 = vsel %vm610, %v815, 0.0
      %v830 = vadd.f32 %v828, %v829
      %v831 = vrot.slane %v830, 4
      %v832 = vadd.f32 %v830, %v831
      %v833 = vrot.slane %v832, 2
      %v834 = vadd.f32 %v832, %v833
      %v835 = vrot.slane %v834, 1
      %v836 = vadd.f32 %v834, %v835
      %vm837 = vcmask 1040384
      %v838 = vsel %vm837, %v807, %v836
      %vm839 = vcmask 58368
      %840 = vst.msk [vmem:[%s181] sm:$0x3] %vm839, %v838
      %p841 = scmp.lt.s32.totalorder %s15, 1
      %s842 = scalar_select %p841, %s15, 1
      %s843 = smul.addr %s842, 8
      %s844 = smul.addr %s843, 8
      %s845 = scalar_lea.vmem %s2, %s844
      %p846 = scmp.lt.s32.totalorder %s15, 1
      %s847 = scalar_select %p846, %s15, 1
      %s848 = smul.addr %s847, 2
      %s849 = scalar_lea.vmem %s3, %s848
      // Predicated region
      $region29: #{down2d.3} parent=27 // pred_check
        %p850 = pneg %p80
      $region30: #{down2d.3} parent=27 // pred_check_branch
        %852 = sbr.rel (%p850) target = $region32
      $region31: #{down2d.3} parent=27 // pred_region
        _
      $region32: #{down2d.3} parent=27 // pred_fallthru
        _
      // Predicated region
      $region33: #{down2d.3} parent=27 // pred_check
        %p853 = pneg %p106
      $region34: #{down2d.3} parent=27 // pred_check_branch
        %855 = sbr.rel (%p853) target = $region36
      $region35: #{down2d.3} parent=27 // pred_region
        _
      $region36: #{down2d.3} parent=27 // pred_fallthru
        _
    $region28: #{down2d.3} parent=5 // pred_fallthru
      _
    %p856 = scmp.le.s32.totalorder 2, %s10
    // Predicated region
    $region37: #{down2d.3} parent=5 // pred_check
      %p857 = pneg %p856
    $region38: #{down2d.3} parent=5 // pred_check_branch
      %859 = sbr.rel (%p857) target = $region40
    $region39: #{down2d.3} parent=5 // pred_region
      %s860 = ssub.s32 %s10, 2
      // Predicated region
      $region41: #{down2d.3} parent=39 // pred_check
        %p861 = pneg %p86
      $region42: #{down2d.3} parent=39 // pred_check_branch
        %863 = sbr.rel (%p861) target = $region44
      $region43: #{down2d.3} parent=39 // pred_region
        %p864 = scmp.lt.s32.totalorder %s16, 1
        %s865 = scalar_select %p864, %s16, 1
        %s866 = smul.addr %s865, 8
        %s867 = smul.addr %s866, 8
        %s868 = scalar_lea.vmem %s2, %s867
      $region44: #{down2d.3} parent=39 // pred_fallthru
        _
      // Predicated region
      $region45: #{down2d.3} parent=39 // pred_check
        %p869 = pneg %p112
      $region46: #{down2d.3} parent=39 // pred_check_branch
        %871 = sbr.rel (%p869) target = $region48
      $region47: #{down2d.3} parent=39 // pred_region
        %p872 = scmp.lt.s32.totalorder %s16, 1
        %s873 = scalar_select %p872, %s16, 1
        %s874 = smul.addr %s873, 2
        %s875 = scalar_lea.vmem %s3, %s874
      $region48: #{down2d.3} parent=39 // pred_fallthru
        _
    $region40: #{down2d.3} parent=5 // pred_fallthru
      _
  $region6: #{down2d.3} parent=0 // loop_footer
    %s14 = sadd.s32 1, %s10
  $region7: #{down2d.3} parent=0 // loop_footer_branch
    %9 = sbr.rel target = $region3
  $region8: #{down2d.3} parent=0 // loop_exit
    _

// kernel: down2d.4
$region0: #{down2d.4}
  #allocation0 [shape = 'u32[]', space=smem, size = 0x4, offset = 0x4, fixed_abs, tag = 'smem constant byte address 0x4 - core index']
  #allocation1 [shape = 'u32[144,128]{1,0:T(1,128)}', space=vmem, size = 0x12000, scoped, tag = 'internal scratch']
  #allocation2 [shape = 'f32[10,10,8]{2,1,0:T(8,128)}', space=vmem, size = 0x14000, scoped, tag = 'scratch operand']
  %s0 = inlined_call_operand.vmem [shape: f32[2,8,8,8], index: 0, kind: input, shape index: {}]
  %s1 = inlined_call_operand.vmem [shape: f32[1,8], index: 1, kind: input, shape index: {}]
  %s2 = inlined_call_operand.vmem [shape: f32[1,8], index: 2, kind: input, shape index: {}]
  %s3 = inlined_call_operand.vmem [shape: bf16[72,8], index: 3, kind: input, shape index: {}]
  %s4 = inlined_call_operand.vmem [shape: f32[2,64,8], index: 4, kind: output, shape index: {0}]
  %s5 = inlined_call_operand.vmem [shape: f32[2,2,8], index: 5, kind: output, shape index: {1}]
  %6 = xla_tuple %s4, %s5
  %s7 = sld [smem:[#allocation0]]
  $region57: #{down2d.4} parent=0
    _
  %s9 = ssub.s32 1, %s7
  %s10 = scalar_select 0, %s9, %s7
  loop: start=0, step=1, limit=4
  $region2: #{down2d.4} parent=0 // loop_pre_header
    _
  $region3: #{down2d.4} parent=0 // loop_header
    %s12 = sphi 0, %s16
    %p13 = scmp.ge.s32.totalorder %s12, 4
    %s22 = sphi 0, %s24
    %s25 = sphi 0, %s22
    %s26 = sphi 0, %s25
    %s42 = sphi 0, %s26
    %s46 = sphi 0, %s46
    %s48 = sphi 0, %s46
    %s49 = sphi 0, %s48
    %s63 = sphi 0, %s49
    %s67 = sphi 0, %s67
    %s69 = sphi 0, %s67
    %s70 = sphi 0, %s69
    %s84 = sphi 0, %s70
    %s88 = sphi 0, %s88
    %s90 = sphi 0, %s88
    %s91 = sphi 0, %s90
    %s105 = sphi 0, %s91
    %s111 = sphi 0, %s113
    %s114 = sphi 0, %s111
    %s115 = sphi 0, %s114
    %s131 = sphi 0, %s115
    %s137 = sphi 0, %s139
    %s140 = sphi 0, %s137
    %s141 = sphi 0, %s140
    %s157 = sphi 0, %s141
  $region4: #{down2d.4} parent=0 // loop_header_branch
    %15 = sbr.rel (%p13) target = $region8
  $region5: #{down2d.4} parent=0 // loop_body
    %s17 = ssub.s32 %s12, 1
    %s18 = ssub.s32 %s12, 2
    %s19 = sadd.s32 %s12, 1
    %s20 = ssub.s32 %s12, %s19
    %p21 = scmp.eq.s32.totalorder %s20, 0
    %s23 = sadd.s32 %s22, 1
    %s24 = scalar_select %p21, %s22, %s23
    %p27 = pneg %p21
    %p28 = scmp.eq.s32.totalorder %s12, 1
    %p29 = por %p27, %p28
    %p30 = scmp.ne.s32.totalorder %s22, %s25
    %p31 = scmp.eq.s32.totalorder %s12, 0
    %p32 = por %p30, %p31
    %p33 = scmp.ne.s32.totalorder %s22, %s25
    %p34 = scmp.eq.s32.totalorder %s17, 1
    %p35 = por %p33, %p34
    %p36 = scmp.ne.s32.totalorder %s25, %s26
    %p37 = scmp.eq.s32.totalorder %s17, 0
    %p38 = por %p36, %p37
    %p39 = scmp.ne.s32.totalorder %s25, %s26
    %p40 = scmp.eq.s32.totalorder %s18, 1
    %p41 = por %p39, %p40
    %p43 = scmp.ne.s32.totalorder %s26, %s42
    %p44 = scmp.eq.s32.totalorder %s18, 0
    %p45 = por %p43, %p44
    %s47 = sadd.s32 %s46, 1
    %p50 = scmp.eq.s32.totalorder %s12, 1
    %p51 = scmp.ne.s32.totalorder %s46, %s48
    %p52 = scmp.eq.s32.totalorder %s12, 0
    %p53 = por %p51, %p52
    %p54 = scmp.ne.s32.totalorder %s46, %s48
    %p55 = scmp.eq.s32.totalorder %s17, 1
    %p56 = por %p54, %p55
    %p57 = scmp.ne.s32.totalorder %s48, %s49
    %p58 = scmp.eq.s32.totalorder %s17, 0
    %p59 = por %p57, %p58
    %p60 = scmp.ne.s32.totalorder %s48, %s49
    %p61 = scmp.eq.s32.totalorder %s18, 1
    %p62 = por %p60, %p61
    %p64 = scmp.ne.s32.totalorder %s49, %s63
    %p65 = scmp.eq.s32.totalorder %s18, 0
    %p66 = por %p64, %p65
    %s68 = sadd.s32 %s67, 1
    %p71 = scmp.eq.s32.totalorder %s12, 1
    %p72 = scmp.ne.s32.totalorder %s67, %s69
    %p73 = scmp.eq.s32.totalorder %s12, 0
    %p74 = por %p72, %p73
    %p75 = scmp.ne.s32.totalorder %s67, %s69
    %p76 = scmp.eq.s32.totalorder %s17, 1
    %p77 = por %p75, %p76
    %p78 = scmp.ne.s32.totalorder %s69, %s70
    %p79 = scmp.eq.s32.totalorder %s17, 0
    %p80 = por %p78, %p79
    %p81 = scmp.ne.s32.totalorder %s69, %s70
    %p82 = scmp.eq.s32.totalorder %s18, 1
    %p83 = por %p81, %p82
    %p85 = scmp.ne.s32.totalorder %s70, %s84
    %p86 = scmp.eq.s32.totalorder %s18, 0
    %p87 = por %p85, %p86
    %s89 = sadd.s32 %s88, 1
    %p92 = scmp.eq.s32.totalorder %s12, 1
    %p93 = scmp.ne.s32.totalorder %s88, %s90
    %p94 = scmp.eq.s32.totalorder %s12, 0
    %p95 = por %p93, %p94
    %p96 = scmp.ne.s32.totalorder %s88, %s90
    %p97 = scmp.eq.s32.totalorder %s17, 1
    %p98 = por %p96, %p97
    %p99 = scmp.ne.s32.totalorder %s90, %s91
    %p100 = scmp.eq.s32.totalorder %s17, 0
    %p101 = por %p99, %p100
    %p102 = scmp.ne.s32.totalorder %s90, %s91
    %p103 = scmp.eq.s32.totalorder %s18, 1
    %p104 = por %p102, %p103
    %p106 = scmp.ne.s32.totalorder %s91, %s105
    %p107 = scmp.eq.s32.totalorder %s18, 0
    %p108 = por %p106, %p107
    %s109 = ssub.s32 %s12, %s19
    %p110 = scmp.eq.s32.totalorder %s109, 0
    %s112 = sadd.s32 %s111, 1
    %s113 = scalar_select %p110, %s111, %s112
    %p116 = pneg %p110
    %p117 = scmp.eq.s32.totalorder %s12, 1
    %p118 = por %p116, %p117
    %p119 = scmp.ne.s32.totalorder %s111, %s114
    %p120 = scmp.eq.s32.totalorder %s12, 0
    %p121 = por %p119, %p120
    %p122 = scmp.ne.s32.totalorder %s111, %s114
    %p123 = scmp.eq.s32.totalorder %s17, 1
    %p124 = por %p122, %p123
    %p125 = scmp.ne.s32.totalorder %s114, %s115
    %p126 = scmp.eq.s32.totalorder %s17, 0
    %p127 = por %p125, %p126
    %p128 = scmp.ne.s32.totalorder %s114, %s115
    %p129 = scmp.eq.s32.totalorder %s18, 1
    %p130 = por %p128, %p129
    %p132 = scmp.ne.s32.totalorder %s115, %s131
    %p133 = scmp.eq.s32.totalorder %s18, 0
    %p134 = por %p132, %p133
    %s135 = ssub.s32 %s12, %s19
    %p136 = scmp.eq.s32.totalorder %s135, 0
    %s138 = sadd.s32 %s137, 1
    %s139 = scalar_select %p136, %s137, %s138
    %p142 = pneg %p136
    %p143 = scmp.eq.s32.totalorder %s12, 1
    %p144 = por %p142, %p143
    %p145 = scmp.ne.s32.totalorder %s137, %s140
    %p146 = scmp.eq.s32.totalorder %s12, 0
    %p147 = por %p145, %p146
    %p148 = scmp.ne.s32.totalorder %s137, %s140
    %p149 = scmp.eq.s32.totalorder %s17, 1
    %p150 = por %p148, %p149
    %p151 = scmp.ne.s32.totalorder %s140, %s141
    %p152 = scmp.eq.s32.totalorder %s17, 0
    %p153 = por %p151, %p152
    %p154 = scmp.ne.s32.totalorder %s140, %s141
    %p155 = scmp.eq.s32.totalorder %s18, 1
    %p156 = por %p154, %p155
    %p158 = scmp.ne.s32.totalorder %s141, %s157
    %p159 = scmp.eq.s32.totalorder %s18, 0
    %p160 = por %p158, %p159
    %p161 = scmp.le.s32.totalorder 1, %s12
    %p162 = scmp.lt.s32.totalorder %s12, 3
    %p163 = pnand %p161, %p162
    %p164 = pneg %p163
    // Predicated region
    $region9: #{down2d.4} parent=5 // pred_check
      _
    $region10: #{down2d.4} parent=5 // pred_check_branch
      %166 = sbr.rel (%p163) target = $region12
    $region11: #{down2d.4} parent=5 // pred_region
      %s167 = ssub.s32 %s12, 1
      // Predicated region
      $region13: #{down2d.4} parent=11 // pred_check
        %p168 = pneg %p59
      $region14: #{down2d.4} parent=11 // pred_check_branch
        %170 = sbr.rel (%p168) target = $region16
      $region15: #{down2d.4} parent=11 // pred_region
        _
      $region16: #{down2d.4} parent=11 // pred_fallthru
        _
      // Predicated region
      $region17: #{down2d.4} parent=11 // pred_check
        %p171 = pneg %p80
      $region18: #{down2d.4} parent=11 // pred_check_branch
        %173 = sbr.rel (%p171) target = $region20
      $region19: #{down2d.4} parent=11 // pred_region
        _
      $region20: #{down2d.4} parent=11 // pred_fallthru
        _
      // Predicated region
      $region21: #{down2d.4} parent=11 // pred_check
        %p174 = pneg %p101
      $region22: #{down2d.4} parent=11 // pred_check_branch
        %176 = sbr.rel (%p174) target = $region24
      $region23: #{down2d.4} parent=11 // pred_region
        _
      $region24: #{down2d.4} parent=11 // pred_fallthru
        _
    $region12: #{down2d.4} parent=5 // pred_fallthru
      _
    %p177 = scmp.lt.s32.totalorder %s12, 2
    // Predicated region
    $region25: #{down2d.4} parent=5 // pred_check
      %p178 = pneg %p177
    $region26: #{down2d.4} parent=5 // pred_check_branch
      %180 = sbr.rel (%p178) target = $region28
    $region27: #{down2d.4} parent=5 // pred_region
      // Predicated region
      $region29: #{down2d.4} parent=27 // pred_check
        %p181 = pneg %p32
      $region30: #{down2d.4} parent=27 // pred_check_branch
        %183 = sbr.rel (%p181) target = $region32
      $region31: #{down2d.4} parent=27 // pred_region
        %p184 = scmp.lt.s32.totalorder %s12, 1
        %s185 = scalar_select %p184, %s12, 1
        %s186 = smul.addr %s185, 8
        %s187 = smul.addr %s186, 8
        %s188 = scalar_lea.vmem %s0, %s187
      $region32: #{down2d.4} parent=27 // pred_fallthru
        _
    $region28: #{down2d.4} parent=5 // pred_fallthru
      _
    %p189 = scmp.le.s32.totalorder 1, %s12
    %p190 = scmp.lt.s32.totalorder %s12, 3
    %p191 = pnand %p189, %p190
    %p192 = pneg %p191
    // Predicated region
    $region33: #{down2d.4} parent=5 // pred_check
      _
    $region34: #{down2d.4} parent=5 // pred_check_branch
      %194 = sbr.rel (%p191) target = $region36
    $region35: #{down2d.4} parent=5 // pred_region
      %s195 = ssub.s32 %s12, 1
      %p196 = scmp.lt.s32.totalorder %s17, 1
      %s197 = scalar_select %p196, %s17, 1
      %s198 = smul.addr %s197, 8
      %s199 = smul.addr %s198, 8
      %s200 = scalar_lea.vmem %s0, %s199
      %p201 = pneg %p38
      %p202 = pneg %p35
      %p203 = pneg %p59
      %p204 = pneg %p56
      %p205 = pneg %p80
      %p206 = pneg %p77
      %p207 = pneg %p101
      %p208 = pneg %p98
      %p209 = pneg %p127
      %p210 = pneg %p124
      %p211 = scmp.lt.s32.totalorder %s17, 1
      %s212 = scalar_select %p211, %s17, 1
      %s213 = smul.addr %s212, 8
      %s214 = smul.addr %s213, 8
      %s215 = scalar_lea.vmem %s4, %s214
      %p216 = pneg %p153
      %p217 = pneg %p150
      %p218 = scmp.lt.s32.totalorder %s17, 1
      %s219 = scalar_select %p218, %s17, 1
      %s220 = smul.addr %s219, 2
      %s221 = scalar_lea.vmem %s5, %s220
      %p222 = scmp.lt.s32.totalorder %s17, 1
      %s223 = scalar_select %p222, %s17, 1
      %s224 = smul.addr %s223, 8
      %s225 = smul.addr %s224, 8
      %s226 = scalar_lea.vmem %s0, %s225
      %p227 = scmp.lt.s32.totalorder %s17, 1
      %s228 = scalar_select %p227, %s17, 1
      %s229 = smul.addr %s228, 8
      %s230 = smul.addr %s229, 8
      %s231 = scalar_lea.vmem %s4, %s230
      %p232 = scmp.lt.s32.totalorder %s17, 1
      %s233 = scalar_select %p232, %s17, 1
      %s234 = smul.addr %s233, 2
      %s235 = scalar_lea.vmem %s5, %s234
      %vm237 = vcmask 64512
      %238 = vst.msk [vmem:[#allocation2] sm:$0xff] %vm237, 0.0
      %vm239 = vcmask 58368
      %240 = vst.msk [vmem:[#allocation2 + $0x8] sm:$0x3] %vm239, 0.0
      %241 = vst.msk [vmem:[#allocation2 + $0x10] sm:$0xff] %vm237, 0.0
      %242 = vst.msk [vmem:[#allocation2 + $0x18] sm:$0x3] %vm239, 0.0
      %243 = vst.msk [vmem:[#allocation2 + $0x20] sm:$0xff] %vm237, 0.0
      %244 = vst.msk [vmem:[#allocation2 + $0x28] sm:$0x3] %vm239, 0.0
      %245 = vst.msk [vmem:[#allocation2 + $0x30] sm:$0xff] %vm237, 0.0
      %246 = vst.msk [vmem:[#allocation2 + $0x38] sm:$0x3] %vm239, 0.0
      %247 = vst.msk [vmem:[#allocation2 + $0x40] sm:$0xff] %vm237, 0.0
      %248 = vst.msk [vmem:[#allocation2 + $0x48] sm:$0x3] %vm239, 0.0
      %249 = vst.msk [vmem:[#allocation2 + $0x50] sm:$0xff] %vm237, 0.0
      %250 = vst.msk [vmem:[#allocation2 + $0x58] sm:$0x3] %vm239, 0.0
      %251 = vst.msk [vmem:[#allocation2 + $0x60] sm:$0xff] %vm237, 0.0
      %252 = vst.msk [vmem:[#allocation2 + $0x68] sm:$0x3] %vm239, 0.0
      %253 = vst.msk [vmem:[#allocation2 + $0x70] sm:$0xff] %vm237, 0.0
      %254 = vst.msk [vmem:[#allocation2 + $0x78] sm:$0x3] %vm239, 0.0
      %255 = vst.msk [vmem:[#allocation2 + $0x80] sm:$0xff] %vm237, 0.0
      %256 = vst.msk [vmem:[#allocation2 + $0x88] sm:$0x3] %vm239, 0.0
      %257 = vst.msk [vmem:[#allocation2 + $0x90] sm:$0xff] %vm237, 0.0
      %258 = vst.msk [vmem:[#allocation2 + $0x98] sm:$0x3] %vm239, 0.0
      %v259 = vld [vmem:[%s226] sm:$0xff]
      %v260 = vld [vmem:[%s226 + $0x8] sm:$0xff]
      %v261 = vld [vmem:[%s226 + $0x10] sm:$0xff]
      %v262 = vld [vmem:[%s226 + $0x18] sm:$0xff]
      %v263 = vld [vmem:[%s226 + $0x20] sm:$0xff]
      %v264 = vld [vmem:[%s226 + $0x28] sm:$0xff]
      %v265 = vld [vmem:[%s226 + $0x30] sm:$0xff]
      %v266 = vld [vmem:[%s226 + $0x38] sm:$0xff]
      %v267 = vld [vmem:[%s1] sm:$0x1]
      %v268 = vld [vmem:[%s2] sm:$0x1]
      %v270 = vlaneseq
      %v271 = vshrl.u32 %v270, 7
      %v272 = vsub.s32 0, %v271
      %v273 = vrot.slane %v267, %v272
      %v275 = vmul.f32 %v259, %v273
      %v276 = vmul.f32 %v260, %v273
      %v277 = vmul.f32 %v261, %v273
      %v278 = vmul.f32 %v262, %v273
      %v279 = vmul.f32 %v263, %v273
      %v280 = vmul.f32 %v264, %v273
      %v281 = vmul.f32 %v265, %v273
      %v282 = vmul.f32 %v266, %v273
      %v284 = vlaneseq
      %v285 = vshrl.u32 %v284, 7
      %v286 = vsub.s32 0, %v285
      %v287 = vrot.slane %v268, %v286
      %v289 = vadd.f32 %v275, %v287
      %v290 = vadd.f32 %v276, %v287
      %v291 = vadd.f32 %v277, %v287
      %v292 = vadd.f32 %v278, %v287
      %v293 = vadd.f32 %v279, %v287
      %v294 = vadd.f32 %v280, %v287
      %v295 = vadd.f32 %v281, %v287
      %v296 = vadd.f32 %v282, %v287
      %v297 = vmax.f32 %v289, 0.0
      %v298 = vmax.f32 %v290, 0.0
      %v299 = vmax.f32 %v291, 0.0
      %v300 = vmax.f32 %v292, 0.0
      %v301 = vmax.f32 %v293, 0.0
      %v302 = vmax.f32 %v294, 0.0
      %v303 = vmax.f32 %v295, 0.0
      %v304 = vmax.f32 %v296, 0.0
      %s305 = scalar_lea.vmem [#allocation2], 16
      %306 = vst.msk [vmem:[%s305 + $0x1] sm:$0xff] %vm237, %v297
      %307 = vst.msk [vmem:[%s305 + $0x11] sm:$0xff] %vm237, %v298
      %308 = vst.msk [vmem:[%s305 + $0x21] sm:$0xff] %vm237, %v299
      %309 = vst.msk [vmem:[%s305 + $0x31] sm:$0xff] %vm237, %v300
      %310 = vst.msk [vmem:[%s305 + $0x41] sm:$0xff] %vm237, %v301
      %311 = vst.msk [vmem:[%s305 + $0x51] sm:$0xff] %vm237, %v302
      %312 = vst.msk [vmem:[%s305 + $0x61] sm:$0xff] %vm237, %v303
      %313 = vst.msk [vmem:[%s305 + $0x71] sm:$0xff] %vm237, %v304
      %v314 = vld [vmem:[#allocation2] sm:$0xff]
      %v315 = vld [vmem:[#allocation2 + $0x10] sm:$0xff]
      %v316 = vld [vmem:[#allocation2 + $0x20] sm:$0xff]
      %v317 = vld [vmem:[#allocation2 + $0x30] sm:$0xff]
      %v318 = vld [vmem:[#allocation2 + $0x40] sm:$0xff]
      %v319 = vld [vmem:[#allocation2 + $0x50] sm:$0xff]
      %v320 = vld [vmem:[#allocation2 + $0x60] sm:$0xff]
      %v321 = vld [vmem:[#allocation2 + $0x70] sm:$0xff]
      %v322 = vld [vmem:[#allocation2 + $0x1] sm:$0xff]
      %v323 = vld [vmem:[#allocation2 + $0x11] sm:$0xff]
      %v324 = vld [vmem:[#allocation2 + $0x21] sm:$0xff]
      %v325 = vld [vmem:[#allocation2 + $0x31] sm:$0xff]
      %v326 = vld [vmem:[#allocation2 + $0x41] sm:$0xff]
      %v327 = vld [vmem:[#allocation2 + $0x51] sm:$0xff]
      %v328 = vld [vmem:[#allocation2 + $0x61] sm:$0xff]
      %v329 = vld [vmem:[#allocation2 + $0x71] sm:$0xff]
      %v330 = vld [vmem:[#allocation2 + $0x2] sm:$0xff]
      %v331 = vld [vmem:[#allocation2 + $0x12] sm:$0xff]
      %v332 = vld [vmem:[#allocation2 + $0x22] sm:$0xff]
      %v333 = vld [vmem:[#allocation2 + $0x32] sm:$0xff]
      %v334 = vld [vmem:[#allocation2 + $0x42] sm:$0xff]
      %v335 = vld [vmem:[#allocation2 + $0x52] sm:$0xff]
      %v336 = vld [vmem:[#allocation2 + $0x62] sm:$0xff]
      %v337 = vld [vmem:[#allocation2 + $0x72] sm:$0xff]
      %v338 = vld [vmem:[%s305] sm:$0xff]
      %v339 = vld [vmem:[%s305 + $0x10] sm:$0xff]
      %v340 = vld [vmem:[%s305 + $0x20] sm:$0xff]
      %v341 = vld [vmem:[%s305 + $0x30] sm:$0xff]
      %v342 = vld [vmem:[%s305 + $0x40] sm:$0xff]
      %v343 = vld [vmem:[%s305 + $0x50] sm:$0xff]
      %v344 = vld [vmem:[%s305 + $0x60] sm:$0xff]
      %v345 = vld [vmem:[%s305 + $0x70] sm:$0xff]
      %v346 = vld [vmem:[%s305 + $0x1] sm:$0xff]
      %v347 = vld [vmem:[%s305 + $0x11] sm:$0xff]
      %v348 = vld [vmem:[%s305 + $0x21] sm:$0xff]
      %v349 = vld [vmem:[%s305 + $0x31] sm:$0xff]
      %v350 = vld [vmem:[%s305 + $0x41] sm:$0xff]
      %v351 = vld [vmem:[%s305 + $0x51] sm:$0xff]
      %v352 = vld [vmem:[%s305 + $0x61] sm:$0xff]
      %v353 = vld [vmem:[%s305 + $0x71] sm:$0xff]
      %v354 = vld [vmem:[%s305 + $0x2] sm:$0xff]
      %v355 = vld [vmem:[%s305 + $0x12] sm:$0xff]
      %v356 = vld [vmem:[%s305 + $0x22] sm:$0xff]
      %v357 = vld [vmem:[%s305 + $0x32] sm:$0xff]
      %v358 = vld [vmem:[%s305 + $0x42] sm:$0xff]
      %v359 = vld [vmem:[%s305 + $0x52] sm:$0xff]
      %v360 = vld [vmem:[%s305 + $0x62] sm:$0xff]
      %v361 = vld [vmem:[%s305 + $0x72] sm:$0xff]
      %s362 = scalar_lea.vmem [#allocation2], 32
      %v363 = vld [vmem:[%s362] sm:$0xff]
      %v364 = vld [vmem:[%s362 + $0x10] sm:$0xff]
      %v365 = vld [vmem:[%s362 + $0x20] sm:$0xff]
      %v366 = vld [vmem:[%s362 + $0x30] sm:$0xff]
      %v367 = vld [vmem:[%s362 + $0x40] sm:$0xff]
      %v368 = vld [vmem:[%s362 + $0x50] sm:$0xff]
      %v369 = vld [vmem:[%s362 + $0x60] sm:$0xff]
      %v370 = vld [vmem:[%s362 + $0x70] sm:$0xff]
      %v371 = vld [vmem:[%s362 + $0x1] sm:$0xff]
      %v372 = vld [vmem:[%s362 + $0x11] sm:$0xff]
      %v373 = vld [vmem:[%s362 + $0x21] sm:$0xff]
      %v374 = vld [vmem:[%s362 + $0x31] sm:$0xff]
      %v375 = vld [vmem:[%s362 + $0x41] sm:$0xff]
      %v376 = vld [vmem:[%s362 + $0x51] sm:$0xff]
      %v377 = vld [vmem:[%s362 + $0x61] sm:$0xff]
      %v378 = vld [vmem:[%s362 + $0x71] sm:$0xff]
      %v379 = vld [vmem:[%s362 + $0x2] sm:$0xff]
      %v380 = vld [vmem:[%s362 + $0x12] sm:$0xff]
      %v381 = vld [vmem:[%s362 + $0x22] sm:$0xff]
      %v382 = vld [vmem:[%s362 + $0x32] sm:$0xff]
      %v383 = vld [vmem:[%s362 + $0x42] sm:$0xff]
      %v384 = vld [vmem:[%s362 + $0x52] sm:$0xff]
      %v385 = vld [vmem:[%s362 + $0x62] sm:$0xff]
      %v386 = vld [vmem:[%s362 + $0x72] sm:$0xff]
      %395 = vrot.lane.b32.xlu0 %v322, 8
      %v396 = vpop.permute.xlu0 %395
      %397 = vrot.lane.b32.xlu0 %v323, 8
      %v398 = vpop.permute.xlu0 %397
      %399 = vrot.lane.b32.xlu0 %v324, 8
      %v400 = vpop.permute.xlu0 %399
      %401 = vrot.lane.b32.xlu0 %v325, 8
      %v402 = vpop.permute.xlu0 %401
      %403 = vrot.lane.b32.xlu0 %v326, 8
      %v404 = vpop.permute.xlu0 %403
      %405 = vrot.lane.b32.xlu0 %v327, 8
      %v406 = vpop.permute.xlu0 %405
      %407 = vrot.lane.b32.xlu0 %v328, 8
      %v408 = vpop.permute.xlu0 %407
      %409 = vrot.lane.b32.xlu0 %v329, 8
      %v410 = vpop.permute.xlu0 %409
      %427 = vrot.lane.b32.xlu0 %v330, 16
      %v428 = vpop.permute.xlu0 %427
      %429 = vrot.lane.b32.xlu0 %v331, 16
      %v430 = vpop.permute.xlu0 %429
      %431 = vrot.lane.b32.xlu0 %v332, 16
      %v432 = vpop.permute.xlu0 %431
      %433 = vrot.lane.b32.xlu0 %v333, 16
      %v434 = vpop.permute.xlu0 %433
      %435 = vrot.lane.b32.xlu0 %v334, 16
      %v436 = vpop.permute.xlu0 %435
      %437 = vrot.lane.b32.xlu0 %v335, 16
      %v438 = vpop.permute.xlu0 %437
      %439 = vrot.lane.b32.xlu0 %v336, 16
      %v440 = vpop.permute.xlu0 %439
      %441 = vrot.lane.b32.xlu0 %v337, 16
      %v442 = vpop.permute.xlu0 %441
      %459 = vrot.lane.b32.xlu0 %v338, 24
      %v460 = vpop.permute.xlu0 %459
      %461 = vrot.lane.b32.xlu0 %v339, 24
      %v462 = vpop.permute.xlu0 %461
      %463 = vrot.lane.b32.xlu0 %v340, 24
      %v464 = vpop.permute.xlu0 %463
      %465 = vrot.lane.b32.xlu0 %v341, 24
      %v466 = vpop.permute.xlu0 %465
      %467 = vrot.lane.b32.xlu0 %v342, 24
      %v468 = vpop.permute.xlu0 %467
      %469 = vrot.lane.b32.xlu0 %v343, 24
      %v470 = vpop.permute.xlu0 %469
      %471 = vrot.lane.b32.xlu0 %v344, 24
      %v472 = vpop.permute.xlu0 %471
      %473 = vrot.lane.b32.xlu0 %v345, 24
      %v474 = vpop.permute.xlu0 %473
      %491 = vrot.lane.b32.xlu0 %v346, 32
      %v492 = vpop.permute.xlu0 %491
      %493 = vrot.lane.b32.xlu0 %v347, 32
      %v494 = vpop.permute.xlu0 %493
      %495 = vrot.lane.b32.xlu0 %v348, 32
      %v496 = vpop.permute.xlu0 %495
      %497 = vrot.lane.b32.xlu0 %v349, 32
      %v498 = vpop.permute.xlu0 %497
      %499 = vrot.lane.b32.xlu0 %v350, 32
      %v500 = vpop.permute.xlu0 %499
      %501 = vrot.lane.b32.xlu0 %v351, 32
      %v502 = vpop.permute.xlu0 %501
      %503 = vrot.lane.b32.xlu0 %v352, 32
      %v504 = vpop.permute.xlu0 %503
      %505 = vrot.lane.b32.xlu0 %v353, 32
      %v506 = vpop.permute.xlu0 %505
      %523 = vrot.lane.b32.xlu0 %v354, 40
      %v524 = vpop.permute.xlu0 %523
      %525 = vrot.lane.b32.xlu0 %v355, 40
      %v526 = vpop.permute.xlu0 %525
      %527 = vrot.lane.b32.xlu0 %v356, 40
      %v528 = vpop.permute.xlu0 %527
      %529 = vrot.lane.b32.xlu0 %v357, 40
      %v530 = vpop.permute.xlu0 %529
      %531 = vrot.lane.b32.xlu0 %v358, 40
      %v532 = vpop.permute.xlu0 %531
      %533 = vrot.lane.b32.xlu0 %v359, 40
      %v534 = vpop.permute.xlu0 %533
      %535 = vrot.lane.b32.xlu0 %v360, 40
      %v536 = vpop.permute.xlu0 %535
      %537 = vrot.lane.b32.xlu0 %v361, 40
      %v538 = vpop.permute.xlu0 %537
      %555 = vrot.lane.b32.xlu0 %v363, 48
      %v556 = vpop.permute.xlu0 %555
      %557 = vrot.lane.b32.xlu0 %v364, 48
      %v558 = vpop.permute.xlu0 %557
      %559 = vrot.lane.b32.xlu0 %v365, 48
      %v560 = vpop.permute.xlu0 %559
      %561 = vrot.lane.b32.xlu0 %v366, 48
      %v562 = vpop.permute.xlu0 %561
      %563 = vrot.lane.b32.xlu0 %v367, 48
      %v564 = vpop.permute.xlu0 %563
      %565 = vrot.lane.b32.xlu0 %v368, 48
      %v566 = vpop.permute.xlu0 %565
      %567 = vrot.lane.b32.xlu0 %v369, 48
      %v568 = vpop.permute.xlu0 %567
      %569 = vrot.lane.b32.xlu0 %v370, 48
      %v570 = vpop.permute.xlu0 %569
      %587 = vrot.lane.b32.xlu0 %v371, 56
      %v588 = vpop.permute.xlu0 %587
      %589 = vrot.lane.b32.xlu0 %v372, 56
      %v590 = vpop.permute.xlu0 %589
      %591 = vrot.lane.b32.xlu0 %v373, 56
      %v592 = vpop.permute.xlu0 %591
      %593 = vrot.lane.b32.xlu0 %v374, 56
      %v594 = vpop.permute.xlu0 %593
      %595 = vrot.lane.b32.xlu0 %v375, 56
      %v596 = vpop.permute.xlu0 %595
      %597 = vrot.lane.b32.xlu0 %v376, 56
      %v598 = vpop.permute.xlu0 %597
      %599 = vrot.lane.b32.xlu0 %v377, 56
      %v600 = vpop.permute.xlu0 %599
      %601 = vrot.lane.b32.xlu0 %v378, 56
      %v602 = vpop.permute.xlu0 %601
      %619 = vrot.lane.b32.xlu0 %v379, 64
      %v620 = vpop.permute.xlu0 %619
      %621 = vrot.lane.b32.xlu0 %v380, 64
      %v622 = vpop.permute.xlu0 %621
      %623 = vrot.lane.b32.xlu0 %v381, 64
      %v624 = vpop.permute.xlu0 %623
      %625 = vrot.lane.b32.xlu0 %v382, 64
      %v626 = vpop.permute.xlu0 %625
      %627 = vrot.lane.b32.xlu0 %v383, 64
      %v628 = vpop.permute.xlu0 %627
      %629 = vrot.lane.b32.xlu0 %v384, 64
      %v630 = vpop.permute.xlu0 %629
      %631 = vrot.lane.b32.xlu0 %v385, 64
      %v632 = vpop.permute.xlu0 %631
      %633 = vrot.lane.b32.xlu0 %v386, 64
      %v634 = vpop.permute.xlu0 %633
      %v643 = vsel %vm237, %v314, %v396
      %v644 = vsel %vm237, %v315, %v398
      %v645 = vsel %vm237, %v316, %v400
      %v646 = vsel %vm237, %v317, %v402
      %v647 = vsel %vm237, %v318, %v404
      %v648 = vsel %vm237, %v319, %v406
      %v649 = vsel %vm237, %v320, %v408
      %v650 = vsel %vm237, %v321, %v410
      %vm651 = vcmask 130048
      %v652 = vsel %vm651, %v643, %v428
      %v653 = vsel %vm651, %v644, %v430
      %v654 = vsel %vm651, %v645, %v432
      %v655 = vsel %vm651, %v646, %v434
      %v656 = vsel %vm651, %v647, %v436
      %v657 = vsel %vm651, %v648, %v438
      %v658 = vsel %vm651, %v649, %v440
      %v659 = vsel %vm651, %v650, %v442
      %vm660 = vcmask 195584
      %v661 = vsel %vm660, %v652, %v460
      %v662 = vsel %vm660, %v653, %v462
      %v663 = vsel %vm660, %v654, %v464
      %v664 = vsel %vm660, %v655, %v466
      %v665 = vsel %vm660, %v656, %v468
      %v666 = vsel %vm660, %v657, %v470
      %v667 = vsel %vm660, %v658, %v472
      %v668 = vsel %vm660, %v659, %v474
      %vm669 = vcmask 261120
      %v670 = vsel %vm669, %v661, %v492
      %v671 = vsel %vm669, %v662, %v494
      %v672 = vsel %vm669, %v663, %v496
      %v673 = vsel %vm669, %v664, %v498
      %v674 = vsel %vm669, %v665, %v500
      %v675 = vsel %vm669, %v666, %v502
      %v676 = vsel %vm669, %v667, %v504
      %v677 = vsel %vm669, %v668, %v506
      %vm678 = vcmask 326656
      %v679 = vsel %vm678, %v670, %v524
      %v680 = vsel %vm678, %v671, %v526
      %v681 = vsel %vm678, %v672, %v528
      %v682 = vsel %vm678, %v673, %v530
      %v683 = vsel %vm678, %v674, %v532
      %v684 = vsel %vm678, %v675, %v534
      %v685 = vsel %vm678, %v676, %v536
      %v686 = vsel %vm678, %v677, %v538
      %vm687 = vcmask 392192
      %v688 = vsel %vm687, %v679, %v556
      %v689 = vsel %vm687, %v680, %v558
      %v690 = vsel %vm687, %v681, %v560
      %v691 = vsel %vm687, %v682, %v562
      %v692 = vsel %vm687, %v683, %v564
      %v693 = vsel %vm687, %v684, %v566
      %v694 = vsel %vm687, %v685, %v568
      %v695 = vsel %vm687, %v686, %v570
      %vm696 = vcmask 457728
      %v697 = vsel %vm696, %v688, %v588
      %v698 = vsel %vm696, %v689, %v590
      %v699 = vsel %vm696, %v690, %v592
      %v700 = vsel %vm696, %v691, %v594
      %v701 = vsel %vm696, %v692, %v596
      %v702 = vsel %vm696, %v693, %v598
      %v703 = vsel %vm696, %v694, %v600
      %v704 = vsel %vm696, %v695, %v602
      %vm705 = vcmask 523264
      %v706 = vsel %vm705, %v697, %v620
      %v707 = vsel %vm705, %v698, %v622
      %v708 = vsel %vm705, %v699, %v624
      %v709 = vsel %vm705, %v700, %v626
      %v710 = vsel %vm705, %v701, %v628
      %v711 = vsel %vm705, %v702, %v630
      %v712 = vsel %vm705, %v703, %v632
      %v713 = vsel %vm705, %v704, %v634
      %v714 = vpack.c.bf16 %v707, %v706
      %v715 = vpack.c.bf16 %v709, %v708
      %v716 = vpack.c.bf16 %v711, %v710
      %v717 = vpack.c.bf16 %v713, %v712
      %v718 = vld [vmem:[%s3] sm:$0xf]
      %v719 = vld [vmem:[%s3 + $0x4] sm:$0xf]
      %v720 = vld [vmem:[%s3 + $0x8] sm:$0xf]
      %v721 = vld [vmem:[%s3 + $0xc] sm:$0xf]
      %v722 = vld [vmem:[%s3 + $0x10] sm:$0xf]
      %v723 = vld [vmem:[%s3 + $0x14] sm:$0xf]
      %v724 = vld [vmem:[%s3 + $0x18] sm:$0xf]
      %v725 = vld [vmem:[%s3 + $0x1c] sm:$0xf]
      %v726 = vld [vmem:[%s3 + $0x20] sm:$0xf]
      %v736 = vunpack.c.l.b16 %v718
      %v737 = vunpack.c.l.b16 %v719
      %v738 = vunpack.c.l.b16 %v720
      %v739 = vunpack.c.l.b16 %v721
      %v740 = vunpack.c.l.b16 %v722
      %v741 = vunpack.c.l.b16 %v723
      %v742 = vunpack.c.l.b16 %v724
      %v743 = vunpack.c.l.b16 %v725
      %v744 = vunpack.c.l.b16 %v726
      %v745 = vpack.c.b16 %v737, %v736
      %v746 = vpack.c.b16 %v739, %v738
      %v747 = vpack.c.b16 %v741, %v740
      %v748 = vpack.c.b16 %v743, %v742
      %v749 = vpack.c.b16 %v744, %v744
      %vm754 = vcmask 588800
      %v756 = vsel %vm754, %v714, 0
      %v759 = vsel %vm754, %v715, 0
      %v762 = vsel %vm754, %v716, 0
      %v765 = vsel %vm754, %v717, 0
      %vm767 = vcmask 1043456
      %v769 = vsel %vm767, %v749, 0
      %771 = vmatprep.subr.bf16.mxu0 0
      %772 = vmatpush1.bf16.msra.mxu0 %v745
      %773 = vmatprep.subr.bf16.mxu0 0
      %774 = vmatpush1.bf16.msra.mxu0 %v746
      %775 = vmatprep.subr.bf16.mxu0 0
      %776 = vmatpush1.bf16.msra.mxu0 %v747
      %777 = vmatprep.subr.bf16.mxu0 0
      %778 = vmatpush1.bf16.msra.mxu0 %v748
      %779 = vmatprep.subr.bf16.mxu0 0
      %780 = vmatpush1.bf16.msra.mxu0 %v769
      %781 = vmatprep.subr.bf16.mxu0 0
      %782 = vmatpush1.bf16.msra.mxu0 0
      %783 = vmatprep.subr.bf16.mxu0 0
      %784 = vmatpush1.bf16.msra.mxu0 0
      %785 = vmatprep.subr.bf16.mxu0 0
      %786 = vmatpush1.bf16.msra.mxu0 0
      %787 = vmatprep.subr.bf16.mxu0 0
      %788 = vmatpush1.bf16.msra.mxu0 0
      %789 = vmatprep.subr.bf16.mxu0 0
      %790 = vmatpush1.bf16.msra.mxu0 0
      %791 = vmatprep.subr.bf16.mxu0 0
      %792 = vmatpush1.bf16.msra.mxu0 0
      %793 = vmatprep.subr.bf16.mxu0 0
      %794 = vmatpush1.bf16.msra.mxu0 0
      %795 = vmatprep.subr.bf16.mxu0 0
      %796 = vmatpush1.bf16.msra.mxu0 0
      %797 = vmatprep.subr.bf16.mxu0 0
      %798 = vmatpush1.bf16.msra.mxu0 0
      %799 = vmatprep.subr.bf16.mxu0 0
      %800 = vmatpush1.bf16.msra.mxu0 0
      %801 = vmatprep.subr.bf16.mxu0 0
      %802 = vmatpush1.bf16.msra.mxu0 0
      %803 = vmatprep.mubr.bf16.mxu0 0
      %804 = vmatmul.mubr.bf16.gmra.mrb[0].mxu0 %v756
      %v805 = vpop.f32.mrb[0].mxu0
      %v806 = vadd.f32 0.0, %v805
      %v807 = vpop.f32.mrb[0].mxu0
      %v808 = vpop.f32.mrb[0].mxu0
      %v809 = vadd.f32 0.0, %v808
      %v810 = vpop.f32.mrb[0].mxu0
      %811 = vmatprep.mubr.bf16.mxu0 0
      %812 = vmatmul.mubr.bf16.gmra.mrb[0].mxu0 %v759
      %v813 = vpop.f32.mrb[0].mxu0
      %v814 = vadd.f32 0.0, %v813
      %v815 = vpop.f32.mrb[0].mxu0
      %v816 = vpop.f32.mrb[0].mxu0
      %v817 = vadd.f32 0.0, %v816
      %v818 = vpop.f32.mrb[0].mxu0
      %819 = vmatprep.mubr.bf16.mxu0 0
      %820 = vmatmul.mubr.bf16.gmra.mrb[0].mxu0 %v762
      %v821 = vpop.f32.mrb[0].mxu0
      %v822 = vadd.f32 0.0, %v821
      %v823 = vpop.f32.mrb[0].mxu0
      %v824 = vpop.f32.mrb[0].mxu0
      %v825 = vadd.f32 0.0, %v824
      %v826 = vpop.f32.mrb[0].mxu0
      %827 = vmatprep.mubr.bf16.mxu0 0
      %828 = vmatmul.mubr.bf16.gmra.mrb[0].mxu0 %v765
      %v829 = vpop.f32.mrb[0].mxu0
      %v830 = vadd.f32 0.0, %v829
      %v831 = vpop.f32.mrb[0].mxu0
      %v832 = vpop.f32.mrb[0].mxu0
      %v833 = vadd.f32 0.0, %v832
      %v834 = vpop.f32.mrb[0].mxu0
      %835 = vdwg.mxu0
      %836 = vst.msk [vmem:[%s231] sm:$0xff] %vm237, %v806
      %837 = vst.msk [vmem:[%s231 + $0x8] sm:$0xff] %vm237, %v809
      %838 = vst.msk [vmem:[%s231 + $0x10] sm:$0xff] %vm237, %v814
      %839 = vst.msk [vmem:[%s231 + $0x18] sm:$0xff] %vm237, %v817
      %840 = vst.msk [vmem:[%s231 + $0x20] sm:$0xff] %vm237, %v822
      %841 = vst.msk [vmem:[%s231 + $0x28] sm:$0xff] %vm237, %v825
      %842 = vst.msk [vmem:[%s231 + $0x30] sm:$0xff] %vm237, %v830
      %843 = vst.msk [vmem:[%s231 + $0x38] sm:$0xff] %vm237, %v833
      %v844 = vsel %vm237, %v806, 0.0
      %v845 = vsel %vm237, %v809, 0.0
      %v846 = vadd.f32 %v844, %v845
      %v847 = vsel %vm237, %v814, 0.0
      %v848 = vadd.f32 %v846, %v847
      %v849 = vsel %vm237, %v817, 0.0
      %v850 = vadd.f32 %v848, %v849
      %v851 = vsel %vm237, %v822, 0.0
      %v852 = vadd.f32 %v850, %v851
      %v853 = vsel %vm237, %v825, 0.0
      %v854 = vadd.f32 %v852, %v853
      %v855 = vsel %vm237, %v830, 0.0
      %v856 = vadd.f32 %v854, %v855
      %v857 = vsel %vm237, %v833, 0.0
      %v858 = vadd.f32 %v856, %v857
      %v859 = vrot.slane %v858, 4
      %v860 = vadd.f32 %v858, %v859
      %v861 = vrot.slane %v860, 2
      %v862 = vadd.f32 %v860, %v861
      %v863 = vrot.slane %v862, 1
      %v864 = vadd.f32 %v862, %v863
      %v865 = vmul.f32 %v806, %v806
      %v866 = vmul.f32 %v809, %v809
      %v867 = vmul.f32 %v814, %v814
      %v868 = vmul.f32 %v817, %v817
      %v869 = vmul.f32 %v822, %v822
      %v870 = vmul.f32 %v825, %v825
      %v871 = vmul.f32 %v830, %v830
      %v872 = vmul.f32 %v833, %v833
      %v873 = vsel %vm237, %v865, 0.0
      %v874 = vsel %vm237, %v866, 0.0
      %v875 = vadd.f32 %v873, %v874
      %v876 = vsel %vm237, %v867, 0.0
      %v877 = vadd.f32 %v875, %v876
      %v878 = vsel %vm237, %v868, 0.0
      %v879 = vadd.f32 %v877, %v878
      %v880 = vsel %vm237, %v869, 0.0
      %v881 = vadd.f32 %v879, %v880
      %v882 = vsel %vm237, %v870, 0.0
      %v883 = vadd.f32 %v881, %v882
      %v884 = vsel %vm237, %v871, 0.0
      %v885 = vadd.f32 %v883, %v884
      %v886 = vsel %vm237, %v872, 0.0
      %v887 = vadd.f32 %v885, %v886
      %v888 = vrot.slane %v887, 4
      %v889 = vadd.f32 %v887, %v888
      %v890 = vrot.slane %v889, 2
      %v891 = vadd.f32 %v889, %v890
      %v892 = vrot.slane %v891, 1
      %v893 = vadd.f32 %v891, %v892
      %vm894 = vcmask 1040384
      %v895 = vsel %vm894, %v864, %v893
      %896 = vst.msk [vmem:[%s235] sm:$0x3] %vm239, %v895
      %p897 = scmp.lt.s32.totalorder %s17, 1
      %s898 = scalar_select %p897, %s17, 1
      %s899 = smul.addr %s898, 8
      %s900 = smul.addr %s899, 8
      %s901 = scalar_lea.vmem %s4, %s900
      %p902 = scmp.lt.s32.totalorder %s17, 1
      %s903 = scalar_select %p902, %s17, 1
      %s904 = smul.addr %s903, 2
      %s905 = scalar_lea.vmem %s5, %s904
      // Predicated region
      $region37: #{down2d.4} parent=35 // pred_check
        %p906 = pneg %p124
      $region38: #{down2d.4} parent=35 // pred_check_branch
        %908 = sbr.rel (%p906) target = $region40
      $region39: #{down2d.4} parent=35 // pred_region
        _
      $region40: #{down2d.4} parent=35 // pred_fallthru
        _
      // Predicated region
      $region41: #{down2d.4} parent=35 // pred_check
        %p909 = pneg %p150
      $region42: #{down2d.4} parent=35 // pred_check_branch
        %911 = sbr.rel (%p909) target = $region44
      $region43: #{down2d.4} parent=35 // pred_region
        _
      $region44: #{down2d.4} parent=35 // pred_fallthru
        _
    $region36: #{down2d.4} parent=5 // pred_fallthru
      _
    %p912 = scmp.le.s32.totalorder 2, %s12
    // Predicated region
    $region45: #{down2d.4} parent=5 // pred_check
      %p913 = pneg %p912
    $region46: #{down2d.4} parent=5 // pred_check_branch
      %915 = sbr.rel (%p913) target = $region48
    $region47: #{down2d.4} parent=5 // pred_region
      %s916 = ssub.s32 %s12, 2
      // Predicated region
      $region49: #{down2d.4} parent=47 // pred_check
        %p917 = pneg %p130
      $region50: #{down2d.4} parent=47 // pred_check_branch
        %919 = sbr.rel (%p917) target = $region52
      $region51: #{down2d.4} parent=47 // pred_region
        %p920 = scmp.lt.s32.totalorder %s18, 1
        %s921 = scalar_select %p920, %s18, 1
        %s922 = smul.addr %s921, 8
        %s923 = smul.addr %s922, 8
        %s924 = scalar_lea.vmem %s4, %s923
      $region52: #{down2d.4} parent=47 // pred_fallthru
        _
      // Predicated region
      $region53: #{down2d.4} parent=47 // pred_check
        %p925 = pneg %p156
      $region54: #{down2d.4} parent=47 // pred_check_branch
        %927 = sbr.rel (%p925) target = $region56
      $region55: #{down2d.4} parent=47 // pred_region
        %p928 = scmp.lt.s32.totalorder %s18, 1
        %s929 = scalar_select %p928, %s18, 1
        %s930 = smul.addr %s929, 2
        %s931 = scalar_lea.vmem %s5, %s930
      $region56: #{down2d.4} parent=47 // pred_fallthru
        _
    $region48: #{down2d.4} parent=5 // pred_fallthru
      _
  $region6: #{down2d.4} parent=0 // loop_footer
    %s16 = sadd.s32 1, %s12
  $region7: #{down2d.4} parent=0 // loop_footer_branch
    %11 = sbr.rel target = $region3
  $region8: #{down2d.4} parent=0 // loop_exit
    _

</llo_original>
